<compile_context>
chip_gen: v7x
topology: tpu7x:2x2x1
jax: 0.10.0
libtpu: 0.0.40
codegen_flags: <defaults>
</compile_context>

<pallas_src>
import numpy as np
import jax
import jax.numpy as jnp
from jax.experimental import pallas as pl
from jax.experimental.pallas import tpu as pltpu


def _gaussian_1d(window_size: int, sigma: float) -> np.ndarray:
    """Matches gaussian() in the PyTorch module (normalized 1D gaussian)."""
    xs = np.arange(window_size, dtype=np.float64)
    g = np.exp(-((xs - window_size // 2) ** 2) / (2.0 * sigma ** 2))
    return (g / g.sum()).astype(np.float32)


def _band_matrix(n: int, g: np.ndarray) -> np.ndarray:
    """Banded matrix M (n,n) with M[j, w] = g[j - w + P] for |j - w| <= P.

    x @ M == 1D "same" convolution of each row of x with g under zero padding
    (out-of-range taps are simply absent == multiplied by zero).
    """
    K = g.shape[0]
    P = K // 2
    M = np.zeros((n, n), dtype=np.float32)
    for j in range(n):
        for w in range(max(0, j - P), min(n - 1, j + P) + 1):
            M[j, w] = g[j - w + P]
    return M


def _pick_planes_per_block(num_planes: int, H: int) -> int:
    """Plane-group size Tp per grid step.

    Constraints / policy (per review):
      * Tp divides num_planes and (Tp*H) % 8 == 0 (sublane tiling of the block).
      * Keep the fused 5-stream sublane depth 5*Tp*H <= 640 so the block-diag
        column-pass matrix stays small (<= 640^2 f32 = 1.6 MiB).
      * Prefer >= 2 grid steps so the "parallel" axis can use both v7x cores.
    """
    cands = [d for d in range(1, num_planes + 1)
             if num_planes % d == 0 and (d * H) % 8 == 0 and 5 * d * H <= 640]
    if not cands:
        # Full-extent fallback: block first dim == full array dim is always a
        # legal block shape (may be large; only hit for odd H not divisible
        # by 8 with no suitable divisor).
        return num_planes
    multi = [d for d in cands if num_planes // d >= 2]
    pool = multi if multi else cands
    return max(pool)


def _ssim_rowsum_kernel(cb_ref, rb_ref, x1_ref, x2_ref, out_ref):
    """One grid step: Tp planes stacked along sublanes, 5 fused conv streams.

    cb_ref: (5*Tp*H, 5*Tp*H) block-diag column-pass band kron(I_{5*Tp}, Bh^T).
    rb_ref: (W, W)           row-pass band Bw.
    x1_ref, x2_ref: (Tp*H, W) image planes (f32), rows = plane-major, H-minor.
    out_ref: (Tp*H, 1)       per-row sums over W of the SSIM map.
    """
    a = x1_ref[...]
    b = x2_ref[...]
    # Hoisted constant loads (loaded exactly once per step).
    cb = cb_ref[...]
    rb = rb_ref[...]

    tph = a.shape[0]

    # Five conv inputs stacked along sublanes: (5*Tp*H, W).
    xs = jnp.concatenate([a, b, a * a, b * b, a * b], axis=0)

    # Separable "same" Gaussian conv for all five streams in 2 MXU matmuls.
    t = jnp.dot(cb, xs, preferred_element_type=jnp.float32)   # column (H) pass
    y = jnp.dot(t, rb, preferred_element_type=jnp.float32)    # row (W) pass

    mu1 = y[0 * tph:1 * tph, :]
    mu2 = y[1 * tph:2 * tph, :]
    e11 = y[2 * tph:3 * tph, :]
    e22 = y[3 * tph:4 * tph, :]
    e12 = y[4 * tph:5 * tph, :]

    mu1_sq = mu1 * mu1
    mu2_sq = mu2 * mu2
    mu1_mu2 = mu1 * mu2
    sigma1_sq = e11 - mu1_sq
    sigma2_sq = e22 - mu2_sq
    sigma12 = e12 - mu1_mu2

    C1 = 0.01 ** 2
    C2 = 0.03 ** 2
    num = (2.0 * mu1_mu2 + C1) * (2.0 * sigma12 + C2)
    den = (mu1_sq + mu2_sq + C1) * (sigma1_sq + sigma2_sq + C2)
    # Exact divide (approx EUP reciprocal rejected to hold the 1e-3 tolerance).
    ssim = num / den                                           # (Tp*H, W)

    # Fused reduction over W (lanes); tiny (Tp*H, 1) store.
    out_ref[...] = jnp.sum(ssim, axis=1, keepdims=True)


def ssim_pallas(img1, img2, window_size: int = 11, size_average: bool = True):
    """JAX/Pallas equivalent of SSIM(window_size, size_average)(img1, img2)."""
    assert img1.shape == img2.shape and img1.ndim == 4
    B, C, H, W = img1.shape
    NP = B * C

    g = _gaussian_1d(window_size, 1.5)
    bh = _band_matrix(H, g).T    # (H, H): column pass, applied on the left
    bw = _band_matrix(W, g)      # (W, W): row pass, applied on the right

    Tp = _pick_planes_per_block(NP, H)
    NPb = NP // Tp
    TpH = Tp * H

    # Block-diag column-pass matrix for the 5 streams x Tp planes stacked
    # along sublanes.  Small by construction (policy caps 5*Tp*H <= 640).
    cb5 = np.kron(np.eye(5 * Tp, dtype=np.float32), bh).astype(np.float32)

    # Zero-copy layout fold: contiguous reshape only, no transpose HBM pass.
    x1 = img1.astype(jnp.float32).reshape(NP * H, W)
    x2 = img2.astype(jnp.float32).reshape(NP * H, W)

    row_sums = pl.pallas_call(
        _ssim_rowsum_kernel,
        out_shape=jax.ShapeDtypeStruct((NP * H, 1), jnp.float32),
        grid_spec=pltpu.PrefetchScalarGridSpec(
            num_scalar_prefetch=0,
            grid=(NPb,),
            in_specs=[
                pl.BlockSpec((5 * TpH, 5 * TpH), lambda i: (0, 0)),  # cb5 (const)
                pl.BlockSpec((W, W), lambda i: (0, 0)),              # bw  (const)
                pl.BlockSpec((TpH, W), lambda i: (i, 0)),            # img1 planes
                pl.BlockSpec((TpH, W), lambda i: (i, 0)),            # img2 planes
            ],
            out_specs=pl.BlockSpec((TpH, 1), lambda i: (i, 0)),
        ),
        compiler_params=pltpu.CompilerParams(
            dimension_semantics=("parallel",),
            vmem_limit_bytes=32 * 1024 * 1024),
    )(jnp.asarray(cb5), jnp.asarray(bw), x1, x2)

    # Tiny final reduction in plain JAX.
    # row_sums[(p*H + h), 0] = sum_w ssim_map[p, h, w].
    per_batch = row_sums.reshape(B, C * H).sum(axis=1)         # (B,)

    if size_average:
        return per_batch.sum() / (B * C * H * W)
    # size_average=False: mean(1).mean(1).mean(1) -> per-batch mean over (C,H,W)
    return per_batch / (C * H * W)


def _ssim_reference(img1, img2, window_size: int = 11, size_average: bool = True):
    """Pure-JAX reference mirroring the PyTorch _ssim (correctness check only)."""
    B, C, H, W = img1.shape
    P = window_size // 2
    g = jnp.asarray(_gaussian_1d(window_size, 1.5))
    w2d = jnp.outer(g, g)
    win = jnp.broadcast_to(w2d[None, None], (C, 1, window_size, window_size))

    def conv(x):
        return jax.lax.conv_general_dilated(
            x, win, window_strides=(1, 1), padding=[(P, P), (P, P)],
            dimension_numbers=("NCHW", "OIHW", "NCHW"),
            feature_group_count=C, precision=jax.lax.Precision.HIGHEST)

    mu1, mu2 = conv(img1), conv(img2)
    mu1_sq, mu2_sq, mu1_mu2 = mu1 * mu1, mu2 * mu2, mu1 * mu2
    sigma1_sq = conv(img1 * img1) - mu1_sq
    sigma2_sq = conv(img2 * img2) - mu2_sq
    sigma12 = conv(img1 * img2) - mu1_mu2
    C1, C2 = 0.01 ** 2, 0.03 ** 2
    ssim_map = ((2 * mu1_mu2 + C1) * (2 * sigma12 + C2)) / (
        (mu1_sq + mu2_sq + C1) * (sigma1_sq + sigma2_sq + C2))
    if size_average:
        return jnp.mean(ssim_map)
    return jnp.mean(ssim_map, axis=(1, 2, 3))


if __name__ == "__main__":
    key = jax.random.PRNGKey(0)
    k1, k2 = jax.random.split(key)
    B, C, H, W = 2, 4, 16, 16
    img1 = jax.random.uniform(k1, (B, C, H, W), dtype=jnp.float32)
    # img2: a noisy version of img1 so SSIM is non-trivial.
    img2 = jnp.clip(
        img1 + 0.1 * jax.random.normal(k2, (B, C, H, W), dtype=jnp.float32), 0.0, 1.0)

    # size_average=True path (scalar mean)
    out_avg = jax.block_until_ready(ssim_pallas(img1, img2, 11, True))
    ref_avg = jax.block_until_ready(_ssim_reference(img1, img2, 11, True))
    np.testing.assert_allclose(float(out_avg), float(ref_avg), rtol=1e-3, atol=1e-3)

    # size_average=False path (per-batch means)
    out_b = jax.block_until_ready(ssim_pallas(img1, img2, 11, False))
    ref_b = jax.block_until_ready(_ssim_reference(img1, img2, 11, False))
    np.testing.assert_allclose(np.asarray(out_b), np.asarray(ref_b),
                               rtol=1e-3, atol=1e-3)

    print("KERNEL_OK")
</pallas_src>

<mosaic_0001>
module attributes {stable_mosaic.version = 11 : i64} {
  func.func @_ssim_rowsum_kernel(%arg0: i32, %arg1: memref<320x320xf32, #tpu.memory_space<vmem>>, %arg2: memref<16x16xf32, #tpu.memory_space<vmem>>, %arg3: memref<64x16xf32, #tpu.memory_space<vmem>>, %arg4: memref<64x16xf32, #tpu.memory_space<vmem>>, %arg5: memref<64x1xf32, #tpu.memory_space<vmem>>) attributes {dimension_semantics = [#tpu.dimension_semantics<parallel>], iteration_bounds = array<i64: 2>, scalar_prefetch = 0 : i64, scratch_operands = 0 : i64, tpu.core_type = #tpu.core_type<tc>, window_params = [{pipeline_mode = #tpu.pipeline_mode<synchronous>, transform_indices = @transform_0, window_bounds = array<i64: 320, 320>}, {pipeline_mode = #tpu.pipeline_mode<synchronous>, transform_indices = @transform_1, window_bounds = array<i64: 16, 16>}, {transform_indices = @transform_2, window_bounds = array<i64: 64, 16>}, {transform_indices = @transform_3, window_bounds = array<i64: 64, 16>}, {transform_indices = @transform_4, window_bounds = array<i64: 64, 1>}]} {
    %c0 = arith.constant 0 : index
    %c0_0 = arith.constant 0 : index
    %0 = vector.load %arg3[%c0, %c0_0] : memref<64x16xf32, #tpu.memory_space<vmem>>, vector<64x16xf32>
    %c0_1 = arith.constant 0 : index
    %c0_2 = arith.constant 0 : index
    %1 = vector.load %arg4[%c0_1, %c0_2] : memref<64x16xf32, #tpu.memory_space<vmem>>, vector<64x16xf32>
    %c0_3 = arith.constant 0 : index
    %c0_4 = arith.constant 0 : index
    %2 = vector.load %arg1[%c0_3, %c0_4] : memref<320x320xf32, #tpu.memory_space<vmem>>, vector<320x320xf32>
    %c0_5 = arith.constant 0 : index
    %c0_6 = arith.constant 0 : index
    %3 = vector.load %arg2[%c0_5, %c0_6] : memref<16x16xf32, #tpu.memory_space<vmem>>, vector<16x16xf32>
    %4 = arith.mulf %0, %0 : vector<64x16xf32>
    %5 = arith.mulf %1, %1 : vector<64x16xf32>
    %6 = arith.mulf %0, %1 : vector<64x16xf32>
    %7 = tpu.concatenate %0, %1, %4, %5, %6 in 0 : vector<64x16xf32>, vector<64x16xf32>, vector<64x16xf32>, vector<64x16xf32>, vector<64x16xf32> -> vector<320x16xf32>
    %cst = arith.constant dense<0.000000e+00> : vector<320x16xf32>
    %8 = tpu.matmul %2, %7, %cst {dimension_numbers = #tpu.dot_dimension_numbers<[1], [0], [0], [1], [0, 0, 1, 1], [], []>} : vector<320x320xf32>, vector<320x16xf32>, vector<320x16xf32> -> vector<320x16xf32>
    %cst_7 = arith.constant dense<0.000000e+00> : vector<320x16xf32>
    %9 = tpu.matmul %8, %3, %cst_7 {dimension_numbers = #tpu.dot_dimension_numbers<[1], [0], [0], [1], [0, 0, 1, 1], [], []>} : vector<320x16xf32>, vector<16x16xf32>, vector<320x16xf32> -> vector<320x16xf32>
    %10 = vector.extract_strided_slice %9 {offsets = [0, 0], sizes = [64, 16], strides = [1, 1]} : vector<320x16xf32> to vector<64x16xf32>
    %11 = vector.extract_strided_slice %9 {offsets = [64, 0], sizes = [64, 16], strides = [1, 1]} : vector<320x16xf32> to vector<64x16xf32>
    %12 = vector.extract_strided_slice %9 {offsets = [128, 0], sizes = [64, 16], strides = [1, 1]} : vector<320x16xf32> to vector<64x16xf32>
    %13 = vector.extract_strided_slice %9 {offsets = [192, 0], sizes = [64, 16], strides = [1, 1]} : vector<320x16xf32> to vector<64x16xf32>
    %14 = vector.extract_strided_slice %9 {offsets = [256, 0], sizes = [64, 16], strides = [1, 1]} : vector<320x16xf32> to vector<64x16xf32>
    %15 = arith.mulf %10, %10 : vector<64x16xf32>
    %16 = arith.mulf %11, %11 : vector<64x16xf32>
    %17 = arith.mulf %10, %11 : vector<64x16xf32>
    %18 = arith.subf %12, %15 : vector<64x16xf32>
    %19 = arith.subf %13, %16 : vector<64x16xf32>
    %20 = arith.subf %14, %17 : vector<64x16xf32>
    %cst_8 = arith.constant 2.000000e+00 : f32
    %21 = vector.broadcast %cst_8 : f32 to vector<64x16xf32>
    %22 = arith.mulf %21, %17 : vector<64x16xf32>
    %cst_9 = arith.constant 9.99999974E-5 : f32
    %23 = vector.broadcast %cst_9 : f32 to vector<64x16xf32>
    %24 = arith.addf %22, %23 : vector<64x16xf32>
    %cst_10 = arith.constant 2.000000e+00 : f32
    %25 = vector.broadcast %cst_10 : f32 to vector<64x16xf32>
    %26 = arith.mulf %25, %20 : vector<64x16xf32>
    %cst_11 = arith.constant 8.99999984E-4 : f32
    %27 = vector.broadcast %cst_11 : f32 to vector<64x16xf32>
    %28 = arith.addf %26, %27 : vector<64x16xf32>
    %29 = arith.mulf %24, %28 : vector<64x16xf32>
    %30 = arith.addf %15, %16 : vector<64x16xf32>
    %cst_12 = arith.constant 9.99999974E-5 : f32
    %31 = vector.broadcast %cst_12 : f32 to vector<64x16xf32>
    %32 = arith.addf %30, %31 : vector<64x16xf32>
    %33 = arith.addf %18, %19 : vector<64x16xf32>
    %cst_13 = arith.constant 8.99999984E-4 : f32
    %34 = vector.broadcast %cst_13 : f32 to vector<64x16xf32>
    %35 = arith.addf %33, %34 : vector<64x16xf32>
    %36 = arith.mulf %32, %35 : vector<64x16xf32>
    %37 = arith.divf %29, %36 : vector<64x16xf32>
    %cst_14 = arith.constant dense<0.000000e+00> : vector<64xf32>
    %38 = vector.multi_reduction <add>, %37, %cst_14 [1] : vector<64x16xf32> to vector<64xf32>
    %39 = vector.shape_cast %38 : vector<64xf32> to vector<64x1xf32>
    %c0_15 = arith.constant 0 : index
    %c0_16 = arith.constant 0 : index
    %40 = vector.load %arg5[%c0_15, %c0_16] : memref<64x1xf32, #tpu.memory_space<vmem>>, vector<64x1xf32>
    tpu.vector_store %arg5[%c0_15, %c0_16], %39 {strides = array<i32>} : memref<64x1xf32, #tpu.memory_space<vmem>>, vector<64x1xf32>,
    return
  }
  func.func @transform_0(%arg0: i32) -> (i32, i32) {
    %c0_i32 = arith.constant 0 : i32
    %c0_i32_0 = arith.constant 0 : i32
    %c0_i32_1 = arith.constant 0 : i32
    return %c0_i32, %c0_i32_0 : i32, i32
  }
  func.func @transform_1(%arg0: i32) -> (i32, i32) {
    %c0_i32 = arith.constant 0 : i32
    %c0_i32_0 = arith.constant 0 : i32
    %c0_i32_1 = arith.constant 0 : i32
    return %c0_i32, %c0_i32_0 : i32, i32
  }
  func.func @transform_2(%arg0: i32) -> (i32, i32) {
    %c0_i32 = arith.constant 0 : i32
    %c0_i32_0 = arith.constant 0 : i32
    return %arg0, %c0_i32 : i32, i32
  }
  func.func @transform_3(%arg0: i32) -> (i32, i32) {
    %c0_i32 = arith.constant 0 : i32
    %c0_i32_0 = arith.constant 0 : i32
    return %arg0, %c0_i32 : i32, i32
  }
  func.func @transform_4(%arg0: i32) -> (i32, i32) {
    %c0_i32 = arith.constant 0 : i32
    %c0_i32_0 = arith.constant 0 : i32
    return %arg0, %c0_i32 : i32, i32
  }
}

</mosaic_0001>

<llo_original>
// kernel: tpu_custom_call.1
$region0: #{tpu_custom_call.1}
  #allocation0 [shape = 'u32[]', space=smem, size = 0x4, offset = 0x4, fixed_abs, tag = 'smem constant byte address 0x4 - core index']
  #allocation1 [shape = 'u32[144,128]{1,0:T(1,128)}', space=vmem, size = 0x12000, scoped, tag = 'internal scratch']
  %s0 = inlined_call_operand.hbm [shape: f32[320,320], index: 0, kind: input, shape index: {}]
  %s1 = inlined_call_operand.vmem [shape: f32[16,16], index: 1, kind: input, shape index: {}]
  %s2 = inlined_call_operand.vmem [shape: f32[128,16], index: 2, kind: input, shape index: {}]
  %s3 = inlined_call_operand.vmem [shape: f32[128,16], index: 3, kind: input, shape index: {}]
  %s4 = inlined_call_operand.vmem [shape: f32[128,1], index: 4, kind: output, shape index: {}]
  %s5 = sld [smem:[#allocation0]]
  $region53: #{tpu_custom_call.1} parent=0
    _
  %s7 = ssub.s32 1, %s5
  %s8 = scalar_select 0, %s7, %s5
  $region1: #{tpu_custom_call.1} parent=0
    #allocation2 [shape = 'u8[491520]{0}', space=vmem, size = 0x78000, scoped, tag = 'input window, operand 0, single buffered']
    #allocation3 [shape = 's32[2]{0}', space=sflag, size = 0x8, scoped, tag = 'scoped memory for tpu_custom_call.1']
    %9 = vsyncpa [#allocation3], 0
    loop: start=0, step=1, limit=4
    $region2: #{tpu_custom_call.1} parent=1 // loop_pre_header
      _
    $region3: #{tpu_custom_call.1} parent=1 // loop_header
      %s11 = sphi 0, %s15
      %p12 = scmp.ge.s32.totalorder %s11, 4
      %s19 = sphi 0, %s19
      %s21 = sphi 0, %s19
      %s22 = sphi 0, %s21
      %s36 = sphi 0, %s22
      %s40 = sphi 0, %s40
      %s42 = sphi 0, %s40
      %s43 = sphi 0, %s42
      %s57 = sphi 0, %s43
      %s63 = sphi 0, %s65
      %s66 = sphi 0, %s63
      %s67 = sphi 0, %s66
      %s83 = sphi 0, %s67
      %s89 = sphi 0, %s91
      %s92 = sphi 0, %s89
      %s93 = sphi 0, %s92
      %s109 = sphi 0, %s93
      %s115 = sphi 0, %s117
      %s118 = sphi 0, %s115
      %s119 = sphi 0, %s118
      %s135 = sphi 0, %s119
    $region4: #{tpu_custom_call.1} parent=1 // loop_header_branch
      %14 = sbr.rel (%p12) target = $region8
    $region5: #{tpu_custom_call.1} parent=1 // loop_body
      %s16 = ssub.s32 %s11, 1
      %s17 = ssub.s32 %s11, 2
      %s18 = sadd.s32 %s11, 1
      %s20 = sadd.s32 %s19, 1
      %p23 = scmp.eq.s32.totalorder %s11, 1
      %p24 = scmp.ne.s32.totalorder %s19, %s21
      %p25 = scmp.eq.s32.totalorder %s11, 0
      %p26 = por %p24, %p25
      %p27 = scmp.ne.s32.totalorder %s19, %s21
      %p28 = scmp.eq.s32.totalorder %s16, 1
      %p29 = por %p27, %p28
      %p30 = scmp.ne.s32.totalorder %s21, %s22
      %p31 = scmp.eq.s32.totalorder %s16, 0
      %p32 = por %p30, %p31
      %p33 = scmp.ne.s32.totalorder %s21, %s22
      %p34 = scmp.eq.s32.totalorder %s17, 1
      %p35 = por %p33, %p34
      %p37 = scmp.ne.s32.totalorder %s22, %s36
      %p38 = scmp.eq.s32.totalorder %s17, 0
      %p39 = por %p37, %p38
      %s41 = sadd.s32 %s40, 1
      %p44 = scmp.eq.s32.totalorder %s11, 1
      %p45 = scmp.ne.s32.totalorder %s40, %s42
      %p46 = scmp.eq.s32.totalorder %s11, 0
      %p47 = por %p45, %p46
      %p48 = scmp.ne.s32.totalorder %s40, %s42
      %p49 = scmp.eq.s32.totalorder %s16, 1
      %p50 = por %p48, %p49
      %p51 = scmp.ne.s32.totalorder %s42, %s43
      %p52 = scmp.eq.s32.totalorder %s16, 0
      %p53 = por %p51, %p52
      %p54 = scmp.ne.s32.totalorder %s42, %s43
      %p55 = scmp.eq.s32.totalorder %s17, 1
      %p56 = por %p54, %p55
      %p58 = scmp.ne.s32.totalorder %s43, %s57
      %p59 = scmp.eq.s32.totalorder %s17, 0
      %p60 = por %p58, %p59
      %s61 = ssub.s32 %s11, %s18
      %p62 = scmp.eq.s32.totalorder %s61, 0
      %s64 = sadd.s32 %s63, 1
      %s65 = scalar_select %p62, %s63, %s64
      %p68 = pneg %p62
      %p69 = scmp.eq.s32.totalorder %s11, 1
      %p70 = por %p68, %p69
      %p71 = scmp.ne.s32.totalorder %s63, %s66
      %p72 = scmp.eq.s32.totalorder %s11, 0
      %p73 = por %p71, %p72
      %p74 = scmp.ne.s32.totalorder %s63, %s66
      %p75 = scmp.eq.s32.totalorder %s16, 1
      %p76 = por %p74, %p75
      %p77 = scmp.ne.s32.totalorder %s66, %s67
      %p78 = scmp.eq.s32.totalorder %s16, 0
      %p79 = por %p77, %p78
      %p80 = scmp.ne.s32.totalorder %s66, %s67
      %p81 = scmp.eq.s32.totalorder %s17, 1
      %p82 = por %p80, %p81
      %p84 = scmp.ne.s32.totalorder %s67, %s83
      %p85 = scmp.eq.s32.totalorder %s17, 0
      %p86 = por %p84, %p85
      %s87 = ssub.s32 %s11, %s18
      %p88 = scmp.eq.s32.totalorder %s87, 0
      %s90 = sadd.s32 %s89, 1
      %s91 = scalar_select %p88, %s89, %s90
      %p94 = pneg %p88
      %p95 = scmp.eq.s32.totalorder %s11, 1
      %p96 = por %p94, %p95
      %p97 = scmp.ne.s32.totalorder %s89, %s92
      %p98 = scmp.eq.s32.totalorder %s11, 0
      %p99 = por %p97, %p98
      %p100 = scmp.ne.s32.totalorder %s89, %s92
      %p101 = scmp.eq.s32.totalorder %s16, 1
      %p102 = por %p100, %p101
      %p103 = scmp.ne.s32.totalorder %s92, %s93
      %p104 = scmp.eq.s32.totalorder %s16, 0
      %p105 = por %p103, %p104
      %p106 = scmp.ne.s32.totalorder %s92, %s93
      %p107 = scmp.eq.s32.totalorder %s17, 1
      %p108 = por %p106, %p107
      %p110 = scmp.ne.s32.totalorder %s93, %s109
      %p111 = scmp.eq.s32.totalorder %s17, 0
      %p112 = por %p110, %p111
      %s113 = ssub.s32 %s11, %s18
      %p114 = scmp.eq.s32.totalorder %s113, 0
      %s116 = sadd.s32 %s115, 1
      %s117 = scalar_select %p114, %s115, %s116
      %p120 = pneg %p114
      %p121 = scmp.eq.s32.totalorder %s11, 1
      %p122 = por %p120, %p121
      %p123 = scmp.ne.s32.totalorder %s115, %s118
      %p124 = scmp.eq.s32.totalorder %s11, 0
      %p125 = por %p123, %p124
      %p126 = scmp.ne.s32.totalorder %s115, %s118
      %p127 = scmp.eq.s32.totalorder %s16, 1
      %p128 = por %p126, %p127
      %p129 = scmp.ne.s32.totalorder %s118, %s119
      %p130 = scmp.eq.s32.totalorder %s16, 0
      %p131 = por %p129, %p130
      %p132 = scmp.ne.s32.totalorder %s118, %s119
      %p133 = scmp.eq.s32.totalorder %s17, 1
      %p134 = por %p132, %p133
      %p136 = scmp.ne.s32.totalorder %s119, %s135
      %p137 = scmp.eq.s32.totalorder %s17, 0
      %p138 = por %p136, %p137
      %p139 = scmp.le.s32.totalorder 1, %s11
      %p140 = scmp.lt.s32.totalorder %s11, 3
      %p141 = pnand %p139, %p140
      %p142 = pneg %p141
      // Predicated region
      $region9: #{tpu_custom_call.1} parent=5 // pred_check
        _
      $region10: #{tpu_custom_call.1} parent=5 // pred_check_branch
        %144 = sbr.rel (%p141) target = $region12
      $region11: #{tpu_custom_call.1} parent=5 // pred_region
        %s145 = ssub.s32 %s11, 1
        // Predicated region
        $region13: #{tpu_custom_call.1} parent=11 // pred_check
          %p146 = pneg %p32
        $region14: #{tpu_custom_call.1} parent=11 // pred_check_branch
          %148 = sbr.rel (%p146) target = $region16
        $region15: #{tpu_custom_call.1} parent=11 // pred_region
          %s150 = ssub.s32 15360, 15360
          %151 = vsyncadd [#allocation3], %s150
          %s152 = sshll.u32 [#allocation2], 4
          %s153 = int_to_ptr.vmem [resolvable:$true] %s152
          %158 = dma.hbm_to_vmem [thread:$0]  %s0, 15360, %s153, [#allocation3], 384, 384, 24
        $region16: #{tpu_custom_call.1} parent=11 // pred_fallthru
          _
        // Predicated region
        $region17: #{tpu_custom_call.1} parent=11 // pred_check
          %p159 = pneg %p53
        $region18: #{tpu_custom_call.1} parent=11 // pred_check_branch
          %161 = sbr.rel (%p159) target = $region20
        $region19: #{tpu_custom_call.1} parent=11 // pred_region
          _
        $region20: #{tpu_custom_call.1} parent=11 // pred_fallthru
          _
      $region12: #{tpu_custom_call.1} parent=5 // pred_fallthru
        _
      %p162 = scmp.lt.s32.totalorder %s11, 2
      // Predicated region
      $region21: #{tpu_custom_call.1} parent=5 // pred_check
        %p163 = pneg %p162
      $region22: #{tpu_custom_call.1} parent=5 // pred_check_branch
        %165 = sbr.rel (%p163) target = $region24
      $region23: #{tpu_custom_call.1} parent=5 // pred_region
        // Predicated region
        $region25: #{tpu_custom_call.1} parent=23 // pred_check
          %p166 = pneg %p73
        $region26: #{tpu_custom_call.1} parent=23 // pred_check_branch
          %168 = sbr.rel (%p166) target = $region28
        $region27: #{tpu_custom_call.1} parent=23 // pred_region
          %s169 = smul.u32 8, %s11
          %p170 = scmp.lt.s32.totalorder %s169, 15
          %s171 = scalar_select %p170, %s169, 15
          %s172 = smul.addr %s171, 8
          %s173 = scalar_lea.vmem %s2, %s172
          %s174 = smul.u32 8, %s11
        $region28: #{tpu_custom_call.1} parent=23 // pred_fallthru
          _
        // Predicated region
        $region29: #{tpu_custom_call.1} parent=23 // pred_check
          %p175 = pneg %p99
        $region30: #{tpu_custom_call.1} parent=23 // pred_check_branch
          %177 = sbr.rel (%p175) target = $region32
        $region31: #{tpu_custom_call.1} parent=23 // pred_region
          %s178 = smul.u32 8, %s11
          %p179 = scmp.lt.s32.totalorder %s178, 15
          %s180 = scalar_select %p179, %s178, 15
          %s181 = smul.addr %s180, 8
          %s182 = scalar_lea.vmem %s3, %s181
          %s183 = smul.u32 8, %s11
        $region32: #{tpu_custom_call.1} parent=23 // pred_fallthru
          _
      $region24: #{tpu_custom_call.1} parent=5 // pred_fallthru
        _
      %p184 = scmp.le.s32.totalorder 1, %s11
      %p185 = scmp.lt.s32.totalorder %s11, 3
      %p186 = pnand %p184, %p185
      %p187 = pneg %p186
      // Predicated region
      $region33: #{tpu_custom_call.1} parent=5 // pred_check
        _
      $region34: #{tpu_custom_call.1} parent=5 // pred_check_branch
        %189 = sbr.rel (%p186) target = $region36
      $region35: #{tpu_custom_call.1} parent=5 // pred_region
        %s190 = ssub.s32 %s11, 1
        // Predicated region
        $region37: #{tpu_custom_call.1} parent=35 // pred_check
          %p191 = pneg %p32
        $region38: #{tpu_custom_call.1} parent=35 // pred_check_branch
          %193 = sbr.rel (%p191) target = $region40
        $region39: #{tpu_custom_call.1} parent=35 // pred_region
          %194 = dma.done [#allocation3], 15360
        $region40: #{tpu_custom_call.1} parent=35 // pred_fallthru
          _
        %p195 = pneg %p32
        %p196 = pneg %p29
        %p197 = pneg %p53
        %p198 = pneg %p50
        %s199 = smul.u32 8, %s16
        %p200 = scmp.lt.s32.totalorder %s199, 15
        %s201 = scalar_select %p200, %s199, 15
        %s202 = smul.addr %s201, 8
        %s203 = scalar_lea.vmem %s2, %s202
        %p204 = pneg %p79
        %p205 = pneg %p76
        %s206 = smul.u32 8, %s16
        %p207 = scmp.lt.s32.totalorder %s206, 15
        %s208 = scalar_select %p207, %s206, 15
        %s209 = smul.addr %s208, 8
        %s210 = scalar_lea.vmem %s3, %s209
        %p211 = pneg %p105
        %p212 = pneg %p102
        %p213 = pneg %p131
        %p214 = pneg %p128
        %s215 = smul.u32 8, %s16
        %p216 = scmp.lt.s32.totalorder %s215, 15
        %s217 = scalar_select %p216, %s215, 15
        %s218 = smul.addr %s217, 8
        %s219 = scalar_lea.vmem %s4, %s218
        %s220 = smul.u32 8, %s16
        %p221 = scmp.lt.s32.totalorder %s220, 15
        %s222 = scalar_select %p221, %s220, 15
        %s223 = smul.addr %s222, 8
        %s224 = scalar_lea.vmem %s2, %s223
        %s225 = smul.u32 8, %s16
        %s226 = smul.u32 8, %s16
        %p227 = scmp.lt.s32.totalorder %s226, 15
        %s228 = scalar_select %p227, %s226, 15
        %s229 = smul.addr %s228, 8
        %s230 = scalar_lea.vmem %s3, %s229
        %s231 = smul.u32 8, %s16
        %s232 = smul.u32 8, %s16
        %p233 = scmp.lt.s32.totalorder %s232, 15
        %s234 = scalar_select %p233, %s232, 15
        %s235 = smul.addr %s234, 8
        %s236 = scalar_lea.vmem %s4, %s235
        %s237 = smul.u32 8, %s16
        %v238 = vld [vmem:[%s224] sm:$0xff]
        %v239 = vld [vmem:[%s224 + $0x8] sm:$0xff]
        %v240 = vld [vmem:[%s224 + $0x10] sm:$0xff]
        %v241 = vld [vmem:[%s224 + $0x18] sm:$0xff]
        %v242 = vld [vmem:[%s224 + $0x20] sm:$0xff]
        %v243 = vld [vmem:[%s224 + $0x28] sm:$0xff]
        %v244 = vld [vmem:[%s224 + $0x30] sm:$0xff]
        %v245 = vld [vmem:[%s224 + $0x38] sm:$0xff]
        %v246 = vld [vmem:[%s230] sm:$0xff]
        %v247 = vld [vmem:[%s230 + $0x8] sm:$0xff]
        %v248 = vld [vmem:[%s230 + $0x10] sm:$0xff]
        %v249 = vld [vmem:[%s230 + $0x18] sm:$0xff]
        %v250 = vld [vmem:[%s230 + $0x20] sm:$0xff]
        %v251 = vld [vmem:[%s230 + $0x28] sm:$0xff]
        %v252 = vld [vmem:[%s230 + $0x30] sm:$0xff]
        %v253 = vld [vmem:[%s230 + $0x38] sm:$0xff]
        %v254 = vld [vmem:[#allocation2] sm:$0xff]
        %v255 = vld [vmem:[#allocation2 + $0x8] sm:$0xff]
        %v256 = vld [vmem:[#allocation2 + $0x10] sm:$0xff]
        %v257 = vld [vmem:[#allocation2 + $0x18] sm:$0xff]
        %v258 = vld [vmem:[#allocation2 + $0x20] sm:$0xff]
        %v259 = vld [vmem:[#allocation2 + $0x28] sm:$0xff]
        %v260 = vld [vmem:[#allocation2 + $0x30] sm:$0xff]
        %v261 = vld [vmem:[#allocation2 + $0x38] sm:$0xff]
        %v262 = vld [vmem:[#allocation2 + $0x40] sm:$0xff]
        %v263 = vld [vmem:[#allocation2 + $0x48] sm:$0xff]
        %v264 = vld [vmem:[#allocation2 + $0x50] sm:$0xff]
        %v265 = vld [vmem:[#allocation2 + $0x58] sm:$0xff]
        %v266 = vld [vmem:[#allocation2 + $0x60] sm:$0xff]
        %v267 = vld [vmem:[#allocation2 + $0x68] sm:$0xff]
        %v268 = vld [vmem:[#allocation2 + $0x70] sm:$0xff]
        %v269 = vld [vmem:[#allocation2 + $0x78] sm:$0xff]
        %v270 = vld [vmem:[#allocation2 + $0x80] sm:$0xff]
        %v271 = vld [vmem:[#allocation2 + $0x88] sm:$0xff]
        %v272 = vld [vmem:[#allocation2 + $0x90] sm:$0xff]
        %v273 = vld [vmem:[#allocation2 + $0x98] sm:$0xff]
        %v274 = vld [vmem:[#allocation2 + $0xa0] sm:$0xff]
        %v275 = vld [vmem:[#allocation2 + $0xa8] sm:$0xff]
        %v276 = vld [vmem:[#allocation2 + $0xb0] sm:$0xff]
        %v277 = vld [vmem:[#allocation2 + $0xb8] sm:$0xff]
        %v278 = vld [vmem:[#allocation2 + $0xc0] sm:$0xff]
        %v279 = vld [vmem:[#allocation2 + $0xc8] sm:$0xff]
        %v280 = vld [vmem:[#allocation2 + $0xd0] sm:$0xff]
        %v281 = vld [vmem:[#allocation2 + $0xd8] sm:$0xff]
        %v282 = vld [vmem:[#allocation2 + $0xe0] sm:$0xff]
        %v283 = vld [vmem:[#allocation2 + $0xe8] sm:$0xff]
        %v284 = vld [vmem:[#allocation2 + $0xf0] sm:$0xff]
        %v285 = vld [vmem:[#allocation2 + $0xf8] sm:$0xff]
        %v286 = vld [vmem:[#allocation2 + $0x100] sm:$0xff]
        %v287 = vld [vmem:[#allocation2 + $0x108] sm:$0xff]
        %v288 = vld [vmem:[#allocation2 + $0x110] sm:$0xff]
        %v289 = vld [vmem:[#allocation2 + $0x118] sm:$0xff]
        %v290 = vld [vmem:[#allocation2 + $0x120] sm:$0xff]
        %v291 = vld [vmem:[#allocation2 + $0x128] sm:$0xff]
        %v292 = vld [vmem:[#allocation2 + $0x130] sm:$0xff]
        %v293 = vld [vmem:[#allocation2 + $0x138] sm:$0xff]
        %v294 = vld [vmem:[#allocation2 + $0x140] sm:$0xff]
        %v295 = vld [vmem:[#allocation2 + $0x148] sm:$0xff]
        %v296 = vld [vmem:[#allocation2 + $0x150] sm:$0xff]
        %v297 = vld [vmem:[#allocation2 + $0x158] sm:$0xff]
        %v298 = vld [vmem:[#allocation2 + $0x160] sm:$0xff]
        %v299 = vld [vmem:[#allocation2 + $0x168] sm:$0xff]
        %v300 = vld [vmem:[#allocation2 + $0x170] sm:$0xff]
        %v301 = vld [vmem:[#allocation2 + $0x178] sm:$0xff]
        %v302 = vld [vmem:[#allocation2 + $0x180] sm:$0xff]
        %v303 = vld [vmem:[#allocation2 + $0x188] sm:$0xff]
        %v304 = vld [vmem:[#allocation2 + $0x190] sm:$0xff]
        %v305 = vld [vmem:[#allocation2 + $0x198] sm:$0xff]
        %v306 = vld [vmem:[#allocation2 + $0x1a0] sm:$0xff]
        %v307 = vld [vmem:[#allocation2 + $0x1a8] sm:$0xff]
        %v308 = vld [vmem:[#allocation2 + $0x1b0] sm:$0xff]
        %v309 = vld [vmem:[#allocation2 + $0x1b8] sm:$0xff]
        %v310 = vld [vmem:[#allocation2 + $0x1c0] sm:$0xff]
        %v311 = vld [vmem:[#allocation2 + $0x1c8] sm:$0xff]
        %v312 = vld [vmem:[#allocation2 + $0x1d0] sm:$0xff]
        %v313 = vld [vmem:[#allocation2 + $0x1d8] sm:$0xff]
        %v314 = vld [vmem:[#allocation2 + $0x1e0] sm:$0xff]
        %v315 = vld [vmem:[#allocation2 + $0x1e8] sm:$0xff]
        %v316 = vld [vmem:[#allocation2 + $0x1f0] sm:$0xff]
        %v317 = vld [vmem:[#allocation2 + $0x1f8] sm:$0xff]
        %v318 = vld [vmem:[#allocation2 + $0x200] sm:$0xff]
        %v319 = vld [vmem:[#allocation2 + $0x208] sm:$0xff]
        %v320 = vld [vmem:[#allocation2 + $0x210] sm:$0xff]
        %v321 = vld [vmem:[#allocation2 + $0x218] sm:$0xff]
        %v322 = vld [vmem:[#allocation2 + $0x220] sm:$0xff]
        %v323 = vld [vmem:[#allocation2 + $0x228] sm:$0xff]
        %v324 = vld [vmem:[#allocation2 + $0x230] sm:$0xff]
        %v325 = vld [vmem:[#allocation2 + $0x238] sm:$0xff]
        %v326 = vld [vmem:[#allocation2 + $0x240] sm:$0xff]
        %v327 = vld [vmem:[#allocation2 + $0x248] sm:$0xff]
        %v328 = vld [vmem:[#allocation2 + $0x250] sm:$0xff]
        %v329 = vld [vmem:[#allocation2 + $0x258] sm:$0xff]
        %v330 = vld [vmem:[#allocation2 + $0x260] sm:$0xff]
        %v331 = vld [vmem:[#allocation2 + $0x268] sm:$0xff]
        %v332 = vld [vmem:[#allocation2 + $0x270] sm:$0xff]
        %v333 = vld [vmem:[#allocation2 + $0x278] sm:$0xff]
        %v334 = vld [vmem:[#allocation2 + $0x280] sm:$0xff]
        %v335 = vld [vmem:[#allocation2 + $0x288] sm:$0xff]
        %v336 = vld [vmem:[#allocation2 + $0x290] sm:$0xff]
        %v337 = vld [vmem:[#allocation2 + $0x298] sm:$0xff]
        %v338 = vld [vmem:[#allocation2 + $0x2a0] sm:$0xff]
        %v339 = vld [vmem:[#allocation2 + $0x2a8] sm:$0xff]
        %v340 = vld [vmem:[#allocation2 + $0x2b0] sm:$0xff]
        %v341 = vld [vmem:[#allocation2 + $0x2b8] sm:$0xff]
        %v342 = vld [vmem:[#allocation2 + $0x2c0] sm:$0xff]
        %v343 = vld [vmem:[#allocation2 + $0x2c8] sm:$0xff]
        %v344 = vld [vmem:[#allocation2 + $0x2d0] sm:$0xff]
        %v345 = vld [vmem:[#allocation2 + $0x2d8] sm:$0xff]
        %v346 = vld [vmem:[#allocation2 + $0x2e0] sm:$0xff]
        %v347 = vld [vmem:[#allocation2 + $0x2e8] sm:$0xff]
        %v348 = vld [vmem:[#allocation2 + $0x2f0] sm:$0xff]
        %v349 = vld [vmem:[#allocation2 + $0x2f8] sm:$0xff]
        %v350 = vld [vmem:[#allocation2 + $0x300] sm:$0xff]
        %v351 = vld [vmem:[#allocation2 + $0x308] sm:$0xff]
        %v352 = vld [vmem:[#allocation2 + $0x310] sm:$0xff]
        %v353 = vld [vmem:[#allocation2 + $0x318] sm:$0xff]
        %v354 = vld [vmem:[#allocation2 + $0x320] sm:$0xff]
        %v355 = vld [vmem:[#allocation2 + $0x328] sm:$0xff]
        %v356 = vld [vmem:[#allocation2 + $0x330] sm:$0xff]
        %v357 = vld [vmem:[#allocation2 + $0x338] sm:$0xff]
        %v358 = vld [vmem:[#allocation2 + $0x340] sm:$0xff]
        %v359 = vld [vmem:[#allocation2 + $0x348] sm:$0xff]
        %v360 = vld [vmem:[#allocation2 + $0x350] sm:$0xff]
        %v361 = vld [vmem:[#allocation2 + $0x358] sm:$0xff]
        %v362 = vld [vmem:[#allocation2 + $0x360] sm:$0xff]
        %v363 = vld [vmem:[#allocation2 + $0x368] sm:$0xff]
        %v364 = vld [vmem:[#allocation2 + $0x370] sm:$0xff]
        %v365 = vld [vmem:[#allocation2 + $0x378] sm:$0xff]
        %v366 = vld [vmem:[#allocation2 + $0x380] sm:$0xff]
        %v367 = vld [vmem:[#allocation2 + $0x388] sm:$0xff]
        %v368 = vld [vmem:[#allocation2 + $0x390] sm:$0xff]
        %v369 = vld [vmem:[#allocation2 + $0x398] sm:$0xff]
        %v370 = vld [vmem:[#allocation2 + $0x3a0] sm:$0xff]
        %v371 = vld [vmem:[#allocation2 + $0x3a8] sm:$0xff]
        %v372 = vld [vmem:[#allocation2 + $0x3b0] sm:$0xff]
        %v373 = vld [vmem:[#allocation2 + $0x3b8] sm:$0xff]
        %v374 = vld [vmem:[%s1] sm:$0xff]
        %v375 = vld [vmem:[%s1 + $0x8] sm:$0xff]
        %v376 = vmul.f32 %v238, %v238
        %v377 = vmul.f32 %v239, %v239
        %v378 = vmul.f32 %v240, %v240
        %v379 = vmul.f32 %v241, %v241
        %v380 = vmul.f32 %v242, %v242
        %v381 = vmul.f32 %v243, %v243
        %v382 = vmul.f32 %v244, %v244
        %v383 = vmul.f32 %v245, %v245
        %v384 = vmul.f32 %v246, %v246
        %v385 = vmul.f32 %v247, %v247
        %v386 = vmul.f32 %v248, %v248
        %v387 = vmul.f32 %v249, %v249
        %v388 = vmul.f32 %v250, %v250
        %v389 = vmul.f32 %v251, %v251
        %v390 = vmul.f32 %v252, %v252
        %v391 = vmul.f32 %v253, %v253
        %v392 = vmul.f32 %v238, %v246
        %v393 = vmul.f32 %v239, %v247
        %v394 = vmul.f32 %v240, %v248
        %v395 = vmul.f32 %v241, %v249
        %v396 = vmul.f32 %v242, %v250
        %v397 = vmul.f32 %v243, %v251
        %v398 = vmul.f32 %v244, %v252
        %v399 = vmul.f32 %v245, %v253
        %vm400 = vcmask 523264
        %v402 = vsel %vm400, %v256, 0
        %v405 = vsel %vm400, %v259, 0
        %v408 = vsel %vm400, %v262, 0
        %v411 = vsel %vm400, %v265, 0
        %v414 = vsel %vm400, %v268, 0
        %v417 = vsel %vm400, %v271, 0
        %v420 = vsel %vm400, %v274, 0
        %v423 = vsel %vm400, %v277, 0
        %v426 = vsel %vm400, %v280, 0
        %v429 = vsel %vm400, %v283, 0
        %v432 = vsel %vm400, %v286, 0
        %v435 = vsel %vm400, %v289, 0
        %v438 = vsel %vm400, %v292, 0
        %v441 = vsel %vm400, %v295, 0
        %v444 = vsel %vm400, %v298, 0
        %v447 = vsel %vm400, %v301, 0
        %v450 = vsel %vm400, %v304, 0
        %v453 = vsel %vm400, %v307, 0
        %v456 = vsel %vm400, %v310, 0
        %v459 = vsel %vm400, %v313, 0
        %v462 = vsel %vm400, %v316, 0
        %v465 = vsel %vm400, %v319, 0
        %v468 = vsel %vm400, %v322, 0
        %v471 = vsel %vm400, %v325, 0
        %v474 = vsel %vm400, %v328, 0
        %v477 = vsel %vm400, %v331, 0
        %v480 = vsel %vm400, %v334, 0
        %v483 = vsel %vm400, %v337, 0
        %v486 = vsel %vm400, %v340, 0
        %v489 = vsel %vm400, %v343, 0
        %v492 = vsel %vm400, %v346, 0
        %v495 = vsel %vm400, %v349, 0
        %v498 = vsel %vm400, %v352, 0
        %v501 = vsel %vm400, %v355, 0
        %v504 = vsel %vm400, %v358, 0
        %v507 = vsel %vm400, %v361, 0
        %v510 = vsel %vm400, %v364, 0
        %v513 = vsel %vm400, %v367, 0
        %v516 = vsel %vm400, %v370, 0
        %v519 = vsel %vm400, %v373, 0
        %521 = vmatprep.subr.mxu0 0.0
        %522 = vmatpush1.msra.mxu0 %v238
        %523 = vmatprep.subr.mxu0 0.0
        %524 = vmatpush1.msra.mxu0 %v239
        %525 = vmatprep.subr.mxu0 0.0
        %526 = vmatpush1.msra.mxu0 %v240
        %527 = vmatprep.subr.mxu0 0.0
        %528 = vmatpush1.msra.mxu0 %v241
        %529 = vmatprep.subr.mxu0 0.0
        %530 = vmatpush1.msra.mxu0 %v242
        %531 = vmatprep.subr.mxu0 0.0
        %532 = vmatpush1.msra.mxu0 %v243
        %533 = vmatprep.subr.mxu0 0.0
        %534 = vmatpush1.msra.mxu0 %v244
        %535 = vmatprep.subr.mxu0 0.0
        %536 = vmatpush1.msra.mxu0 %v245
        %537 = vmatprep.subr.mxu0 0.0
        %538 = vmatpush1.msra.mxu0 %v246
        %539 = vmatprep.subr.mxu0 0.0
        %540 = vmatpush1.msra.mxu0 %v247
        %541 = vmatprep.subr.mxu0 0.0
        %542 = vmatpush1.msra.mxu0 %v248
        %543 = vmatprep.subr.mxu0 0.0
        %544 = vmatpush1.msra.mxu0 %v249
        %545 = vmatprep.subr.mxu0 0.0
        %546 = vmatpush1.msra.mxu0 %v250
        %547 = vmatprep.subr.mxu0 0.0
        %548 = vmatpush1.msra.mxu0 %v251
        %549 = vmatprep.subr.mxu0 0.0
        %550 = vmatpush1.msra.mxu0 %v252
        %551 = vmatprep.subr.mxu0 0.0
        %552 = vmatpush1.msra.mxu0 %v253
        %553 = vmatprep.subr.mxu0 0.0
        %554 = vmatpush1.msra.mxu0 %v376
        %555 = vmatprep.subr.mxu0 0.0
        %556 = vmatpush1.msra.mxu0 %v377
        %557 = vmatprep.subr.mxu0 0.0
        %558 = vmatpush1.msra.mxu0 %v378
        %559 = vmatprep.subr.mxu0 0.0
        %560 = vmatpush1.msra.mxu0 %v379
        %561 = vmatprep.subr.mxu0 0.0
        %562 = vmatpush1.msra.mxu0 %v380
        %563 = vmatprep.subr.mxu0 0.0
        %564 = vmatpush1.msra.mxu0 %v381
        %565 = vmatprep.subr.mxu0 0.0
        %566 = vmatpush1.msra.mxu0 %v382
        %567 = vmatprep.subr.mxu0 0.0
        %568 = vmatpush1.msra.mxu0 %v383
        %569 = vmatprep.subr.mxu0 0.0
        %570 = vmatpush1.msra.mxu0 %v384
        %571 = vmatprep.subr.mxu0 0.0
        %572 = vmatpush1.msra.mxu0 %v385
        %573 = vmatprep.subr.mxu0 0.0
        %574 = vmatpush1.msra.mxu0 %v386
        %575 = vmatprep.subr.mxu0 0.0
        %576 = vmatpush1.msra.mxu0 %v387
        %577 = vmatprep.subr.mxu0 0.0
        %578 = vmatpush1.msra.mxu0 %v388
        %579 = vmatprep.subr.mxu0 0.0
        %580 = vmatpush1.msra.mxu0 %v389
        %581 = vmatprep.subr.mxu0 0.0
        %582 = vmatpush1.msra.mxu0 %v390
        %583 = vmatprep.subr.mxu0 0.0
        %584 = vmatpush1.msra.mxu0 %v391
        %585 = vmatprep.mubr.f32.mxu0 %v255
        %586 = vmatmul.mubr.f32.gmra.mrb[0].mxu0 %v254
        %v587 = vpop.f32.mrb[0].mxu0
        %v588 = vadd.f32 0.0, %v587
        %v589 = vpop.f32.mrb[0].mxu0
        %590 = vmatprep.mubr.f32.mxu0 %v258
        %591 = vmatmul.mubr.f32.gmra.mrb[0].mxu0 %v257
        %v592 = vpop.f32.mrb[0].mxu0
        %v593 = vadd.f32 0.0, %v592
        %v594 = vpop.f32.mrb[0].mxu0
        %595 = vmatprep.mubr.f32.mxu0 %v261
        %596 = vmatmul.mubr.f32.gmra.mrb[0].mxu0 %v260
        %v597 = vpop.f32.mrb[0].mxu0
        %v598 = vadd.f32 0.0, %v597
        %v599 = vpop.f32.mrb[0].mxu0
        %600 = vmatprep.mubr.f32.mxu0 %v264
        %601 = vmatmul.mubr.f32.gmra.mrb[0].mxu0 %v263
        %v602 = vpop.f32.mrb[0].mxu0
        %v603 = vadd.f32 0.0, %v602
        %v604 = vpop.f32.mrb[0].mxu0
        %605 = vmatprep.mubr.f32.mxu0 %v267
        %606 = vmatmul.mubr.f32.gmra.mrb[0].mxu0 %v266
        %v607 = vpop.f32.mrb[0].mxu0
        %v608 = vadd.f32 0.0, %v607
        %v609 = vpop.f32.mrb[0].mxu0
        %610 = vmatprep.mubr.f32.mxu0 %v270
        %611 = vmatmul.mubr.f32.gmra.mrb[0].mxu0 %v269
        %v612 = vpop.f32.mrb[0].mxu0
        %v613 = vadd.f32 0.0, %v612
        %v614 = vpop.f32.mrb[0].mxu0
        %615 = vmatprep.mubr.f32.mxu0 %v273
        %616 = vmatmul.mubr.f32.gmra.mrb[0].mxu0 %v272
        %v617 = vpop.f32.mrb[0].mxu0
        %v618 = vadd.f32 0.0, %v617
        %v619 = vpop.f32.mrb[0].mxu0
        %620 = vmatprep.mubr.f32.mxu0 %v276
        %621 = vmatmul.mubr.f32.gmra.mrb[0].mxu0 %v275
        %v622 = vpop.f32.mrb[0].mxu0
        %v623 = vadd.f32 0.0, %v622
        %v624 = vpop.f32.mrb[0].mxu0
        %625 = vmatprep.mubr.f32.mxu0 %v279
        %626 = vmatmul.mubr.f32.gmra.mrb[0].mxu0 %v278
        %v627 = vpop.f32.mrb[0].mxu0
        %v628 = vadd.f32 0.0, %v627
        %v629 = vpop.f32.mrb[0].mxu0
        %630 = vmatprep.mubr.f32.mxu0 %v282
        %631 = vmatmul.mubr.f32.gmra.mrb[0].mxu0 %v281
        %v632 = vpop.f32.mrb[0].mxu0
        %v633 = vadd.f32 0.0, %v632
        %v634 = vpop.f32.mrb[0].mxu0
        %635 = vmatprep.mubr.f32.mxu0 %v285
        %636 = vmatmul.mubr.f32.gmra.mrb[0].mxu0 %v284
        %v637 = vpop.f32.mrb[0].mxu0
        %v638 = vadd.f32 0.0, %v637
        %v639 = vpop.f32.mrb[0].mxu0
        %640 = vmatprep.mubr.f32.mxu0 %v288
        %641 = vmatmul.mubr.f32.gmra.mrb[0].mxu0 %v287
        %v642 = vpop.f32.mrb[0].mxu0
        %v643 = vadd.f32 0.0, %v642
        %v644 = vpop.f32.mrb[0].mxu0
        %645 = vmatprep.mubr.f32.mxu0 %v291
        %646 = vmatmul.mubr.f32.gmra.mrb[0].mxu0 %v290
        %v647 = vpop.f32.mrb[0].mxu0
        %v648 = vadd.f32 0.0, %v647
        %v649 = vpop.f32.mrb[0].mxu0
        %650 = vmatprep.mubr.f32.mxu0 %v294
        %651 = vmatmul.mubr.f32.gmra.mrb[0].mxu0 %v293
        %v652 = vpop.f32.mrb[0].mxu0
        %v653 = vadd.f32 0.0, %v652
        %v654 = vpop.f32.mrb[0].mxu0
        %655 = vmatprep.mubr.f32.mxu0 %v297
        %656 = vmatmul.mubr.f32.gmra.mrb[0].mxu0 %v296
        %v657 = vpop.f32.mrb[0].mxu0
        %v658 = vadd.f32 0.0, %v657
        %v659 = vpop.f32.mrb[0].mxu0
        %660 = vmatprep.mubr.f32.mxu0 %v300
        %661 = vmatmul.mubr.f32.gmra.mrb[0].mxu0 %v299
        %v662 = vpop.f32.mrb[0].mxu0
        %v663 = vadd.f32 0.0, %v662
        %v664 = vpop.f32.mrb[0].mxu0
        %665 = vmatprep.mubr.f32.mxu0 %v303
        %666 = vmatmul.mubr.f32.gmra.mrb[0].mxu0 %v302
        %v667 = vpop.f32.mrb[0].mxu0
        %v668 = vadd.f32 0.0, %v667
        %v669 = vpop.f32.mrb[0].mxu0
        %670 = vmatprep.mubr.f32.mxu0 %v306
        %671 = vmatmul.mubr.f32.gmra.mrb[0].mxu0 %v305
        %v672 = vpop.f32.mrb[0].mxu0
        %v673 = vadd.f32 0.0, %v672
        %v674 = vpop.f32.mrb[0].mxu0
        %675 = vmatprep.mubr.f32.mxu0 %v309
        %676 = vmatmul.mubr.f32.gmra.mrb[0].mxu0 %v308
        %v677 = vpop.f32.mrb[0].mxu0
        %v678 = vadd.f32 0.0, %v677
        %v679 = vpop.f32.mrb[0].mxu0
        %680 = vmatprep.mubr.f32.mxu0 %v312
        %681 = vmatmul.mubr.f32.gmra.mrb[0].mxu0 %v311
        %v682 = vpop.f32.mrb[0].mxu0
        %v683 = vadd.f32 0.0, %v682
        %v684 = vpop.f32.mrb[0].mxu0
        %685 = vmatprep.mubr.f32.mxu0 %v315
        %686 = vmatmul.mubr.f32.gmra.mrb[0].mxu0 %v314
        %v687 = vpop.f32.mrb[0].mxu0
        %v688 = vadd.f32 0.0, %v687
        %v689 = vpop.f32.mrb[0].mxu0
        %690 = vmatprep.mubr.f32.mxu0 %v318
        %691 = vmatmul.mubr.f32.gmra.mrb[0].mxu0 %v317
        %v692 = vpop.f32.mrb[0].mxu0
        %v693 = vadd.f32 0.0, %v692
        %v694 = vpop.f32.mrb[0].mxu0
        %695 = vmatprep.mubr.f32.mxu0 %v321
        %696 = vmatmul.mubr.f32.gmra.mrb[0].mxu0 %v320
        %v697 = vpop.f32.mrb[0].mxu0
        %v698 = vadd.f32 0.0, %v697
        %v699 = vpop.f32.mrb[0].mxu0
        %700 = vmatprep.mubr.f32.mxu0 %v324
        %701 = vmatmul.mubr.f32.gmra.mrb[0].mxu0 %v323
        %v702 = vpop.f32.mrb[0].mxu0
        %v703 = vadd.f32 0.0, %v702
        %v704 = vpop.f32.mrb[0].mxu0
        %705 = vmatprep.mubr.f32.mxu0 %v327
        %706 = vmatmul.mubr.f32.gmra.mrb[0].mxu0 %v326
        %v707 = vpop.f32.mrb[0].mxu0
        %v708 = vadd.f32 0.0, %v707
        %v709 = vpop.f32.mrb[0].mxu0
        %710 = vmatprep.mubr.f32.mxu0 %v330
        %711 = vmatmul.mubr.f32.gmra.mrb[0].mxu0 %v329
        %v712 = vpop.f32.mrb[0].mxu0
        %v713 = vadd.f32 0.0, %v712
        %v714 = vpop.f32.mrb[0].mxu0
        %715 = vmatprep.mubr.f32.mxu0 %v333
        %716 = vmatmul.mubr.f32.gmra.mrb[0].mxu0 %v332
        %v717 = vpop.f32.mrb[0].mxu0
        %v718 = vadd.f32 0.0, %v717
        %v719 = vpop.f32.mrb[0].mxu0
        %720 = vmatprep.mubr.f32.mxu0 %v336
        %721 = vmatmul.mubr.f32.gmra.mrb[0].mxu0 %v335
        %v722 = vpop.f32.mrb[0].mxu0
        %v723 = vadd.f32 0.0, %v722
        %v724 = vpop.f32.mrb[0].mxu0
        %725 = vmatprep.mubr.f32.mxu0 %v339
        %726 = vmatmul.mubr.f32.gmra.mrb[0].mxu0 %v338
        %v727 = vpop.f32.mrb[0].mxu0
        %v728 = vadd.f32 0.0, %v727
        %v729 = vpop.f32.mrb[0].mxu0
        %730 = vmatprep.mubr.f32.mxu0 %v342
        %731 = vmatmul.mubr.f32.gmra.mrb[0].mxu0 %v341
        %v732 = vpop.f32.mrb[0].mxu0
        %v733 = vadd.f32 0.0, %v732
        %v734 = vpop.f32.mrb[0].mxu0
        %735 = vmatprep.mubr.f32.mxu0 %v345
        %736 = vmatmul.mubr.f32.gmra.mrb[0].mxu0 %v344
        %v737 = vpop.f32.mrb[0].mxu0
        %v738 = vadd.f32 0.0, %v737
        %v739 = vpop.f32.mrb[0].mxu0
        %740 = vmatprep.mubr.f32.mxu0 %v348
        %741 = vmatmul.mubr.f32.gmra.mrb[0].mxu0 %v347
        %v742 = vpop.f32.mrb[0].mxu0
        %v743 = vadd.f32 0.0, %v742
        %v744 = vpop.f32.mrb[0].mxu0
        %745 = vmatprep.mubr.f32.mxu0 %v351
        %746 = vmatmul.mubr.f32.gmra.mrb[0].mxu0 %v350
        %v747 = vpop.f32.mrb[0].mxu0
        %v748 = vadd.f32 0.0, %v747
        %v749 = vpop.f32.mrb[0].mxu0
        %750 = vmatprep.mubr.f32.mxu0 %v354
        %751 = vmatmul.mubr.f32.gmra.mrb[0].mxu0 %v353
        %v752 = vpop.f32.mrb[0].mxu0
        %v753 = vadd.f32 0.0, %v752
        %v754 = vpop.f32.mrb[0].mxu0
        %755 = vmatprep.mubr.f32.mxu0 %v357
        %756 = vmatmul.mubr.f32.gmra.mrb[0].mxu0 %v356
        %v757 = vpop.f32.mrb[0].mxu0
        %v758 = vadd.f32 0.0, %v757
        %v759 = vpop.f32.mrb[0].mxu0
        %760 = vmatprep.mubr.f32.mxu0 %v360
        %761 = vmatmul.mubr.f32.gmra.mrb[0].mxu0 %v359
        %v762 = vpop.f32.mrb[0].mxu0
        %v763 = vadd.f32 0.0, %v762
        %v764 = vpop.f32.mrb[0].mxu0
        %765 = vmatprep.mubr.f32.mxu0 %v363
        %766 = vmatmul.mubr.f32.gmra.mrb[0].mxu0 %v362
        %v767 = vpop.f32.mrb[0].mxu0
        %v768 = vadd.f32 0.0, %v767
        %v769 = vpop.f32.mrb[0].mxu0
        %770 = vmatprep.mubr.f32.mxu0 %v366
        %771 = vmatmul.mubr.f32.gmra.mrb[0].mxu0 %v365
        %v772 = vpop.f32.mrb[0].mxu0
        %v773 = vadd.f32 0.0, %v772
        %v774 = vpop.f32.mrb[0].mxu0
        %775 = vmatprep.mubr.f32.mxu0 %v369
        %776 = vmatmul.mubr.f32.gmra.mrb[0].mxu0 %v368
        %v777 = vpop.f32.mrb[0].mxu0
        %v778 = vadd.f32 0.0, %v777
        %v779 = vpop.f32.mrb[0].mxu0
        %780 = vmatprep.mubr.f32.mxu0 %v372
        %781 = vmatmul.mubr.f32.gmra.mrb[0].mxu0 %v371
        %v782 = vpop.f32.mrb[0].mxu0
        %v783 = vadd.f32 0.0, %v782
        %v784 = vpop.f32.mrb[0].mxu0
        %785 = vdwg.mxu0
        %786 = vmatprep.subr.mxu0 0.0
        %787 = vmatpush1.msra.mxu0 %v392
        %788 = vmatprep.subr.mxu0 0.0
        %789 = vmatpush1.msra.mxu0 %v393
        %790 = vmatprep.subr.mxu0 0.0
        %791 = vmatpush1.msra.mxu0 %v394
        %792 = vmatprep.subr.mxu0 0.0
        %793 = vmatpush1.msra.mxu0 %v395
        %794 = vmatprep.subr.mxu0 0.0
        %795 = vmatpush1.msra.mxu0 %v396
        %796 = vmatprep.subr.mxu0 0.0
        %797 = vmatpush1.msra.mxu0 %v397
        %798 = vmatprep.subr.mxu0 0.0
        %799 = vmatpush1.msra.mxu0 %v398
        %800 = vmatprep.subr.mxu0 0.0
        %801 = vmatpush1.msra.mxu0 %v399
        %802 = vmatprep.subr.mxu0 0.0
        %803 = vmatpush1.msra.mxu0 0.0
        %804 = vmatprep.subr.mxu0 0.0
        %805 = vmatpush1.msra.mxu0 0.0
        %806 = vmatprep.subr.mxu0 0.0
        %807 = vmatpush1.msra.mxu0 0.0
        %808 = vmatprep.subr.mxu0 0.0
        %809 = vmatpush1.msra.mxu0 0.0
        %810 = vmatprep.subr.mxu0 0.0
        %811 = vmatpush1.msra.mxu0 0.0
        %812 = vmatprep.subr.mxu0 0.0
        %813 = vmatpush1.msra.mxu0 0.0
        %814 = vmatprep.subr.mxu0 0.0
        %815 = vmatpush1.msra.mxu0 0.0
        %816 = vmatprep.subr.mxu0 0.0
        %817 = vmatpush1.msra.mxu0 0.0
        %818 = vmatprep.subr.mxu0 0.0
        %819 = vmatpush1.msra.mxu0 0.0
        %820 = vmatprep.subr.mxu0 0.0
        %821 = vmatpush1.msra.mxu0 0.0
        %822 = vmatprep.subr.mxu0 0.0
        %823 = vmatpush1.msra.mxu0 0.0
        %824 = vmatprep.subr.mxu0 0.0
        %825 = vmatpush1.msra.mxu0 0.0
        %826 = vmatprep.subr.mxu0 0.0
        %827 = vmatpush1.msra.mxu0 0.0
        %828 = vmatprep.subr.mxu0 0.0
        %829 = vmatpush1.msra.mxu0 0.0
        %830 = vmatprep.subr.mxu0 0.0
        %831 = vmatpush1.msra.mxu0 0.0
        %832 = vmatprep.subr.mxu0 0.0
        %833 = vmatpush1.msra.mxu0 0.0
        %834 = vmatprep.subr.mxu0 0.0
        %835 = vmatpush1.msra.mxu0 0.0
        %836 = vmatprep.subr.mxu0 0.0
        %837 = vmatpush1.msra.mxu0 0.0
        %838 = vmatprep.subr.mxu0 0.0
        %839 = vmatpush1.msra.mxu0 0.0
        %840 = vmatprep.subr.mxu0 0.0
        %841 = vmatpush1.msra.mxu0 0.0
        %842 = vmatprep.subr.mxu0 0.0
        %843 = vmatpush1.msra.mxu0 0.0
        %844 = vmatprep.subr.mxu0 0.0
        %845 = vmatpush1.msra.mxu0 0.0
        %846 = vmatprep.subr.mxu0 0.0
        %847 = vmatpush1.msra.mxu0 0.0
        %848 = vmatprep.subr.mxu0 0.0
        %849 = vmatpush1.msra.mxu0 0.0
        %850 = vmatprep.mubr.f32.mxu0 0.0
        %851 = vmatmul.mubr.f32.gmra.mrb[0].mxu0 %v402
        %v852 = vpop.f32.mrb[0].mxu0
        %v853 = vadd.f32 %v588, %v852
        %v854 = vpop.f32.mrb[0].mxu0
        %855 = vmatprep.mubr.f32.mxu0 0.0
        %856 = vmatmul.mubr.f32.gmra.mrb[0].mxu0 %v405
        %v857 = vpop.f32.mrb[0].mxu0
        %v858 = vadd.f32 %v593, %v857
        %v859 = vpop.f32.mrb[0].mxu0
        %860 = vmatprep.mubr.f32.mxu0 0.0
        %861 = vmatmul.mubr.f32.gmra.mrb[0].mxu0 %v408
        %v862 = vpop.f32.mrb[0].mxu0
        %v863 = vadd.f32 %v598, %v862
        %v864 = vpop.f32.mrb[0].mxu0
        %865 = vmatprep.mubr.f32.mxu0 0.0
        %866 = vmatmul.mubr.f32.gmra.mrb[0].mxu0 %v411
        %v867 = vpop.f32.mrb[0].mxu0
        %v868 = vadd.f32 %v603, %v867
        %v869 = vpop.f32.mrb[0].mxu0
        %870 = vmatprep.mubr.f32.mxu0 0.0
        %871 = vmatmul.mubr.f32.gmra.mrb[0].mxu0 %v414
        %v872 = vpop.f32.mrb[0].mxu0
        %v873 = vadd.f32 %v608, %v872
        %v874 = vpop.f32.mrb[0].mxu0
        %875 = vmatprep.mubr.f32.mxu0 0.0
        %876 = vmatmul.mubr.f32.gmra.mrb[0].mxu0 %v417
        %v877 = vpop.f32.mrb[0].mxu0
        %v878 = vadd.f32 %v613, %v877
        %v879 = vpop.f32.mrb[0].mxu0
        %880 = vmatprep.mubr.f32.mxu0 0.0
        %881 = vmatmul.mubr.f32.gmra.mrb[0].mxu0 %v420
        %v882 = vpop.f32.mrb[0].mxu0
        %v883 = vadd.f32 %v618, %v882
        %v884 = vpop.f32.mrb[0].mxu0
        %885 = vmatprep.mubr.f32.mxu0 0.0
        %886 = vmatmul.mubr.f32.gmra.mrb[0].mxu0 %v423
        %v887 = vpop.f32.mrb[0].mxu0
        %v888 = vadd.f32 %v623, %v887
        %v889 = vpop.f32.mrb[0].mxu0
        %890 = vmatprep.mubr.f32.mxu0 0.0
        %891 = vmatmul.mubr.f32.gmra.mrb[0].mxu0 %v426
        %v892 = vpop.f32.mrb[0].mxu0
        %v893 = vadd.f32 %v628, %v892
        %v894 = vpop.f32.mrb[0].mxu0
        %895 = vmatprep.mubr.f32.mxu0 0.0
        %896 = vmatmul.mubr.f32.gmra.mrb[0].mxu0 %v429
        %v897 = vpop.f32.mrb[0].mxu0
        %v898 = vadd.f32 %v633, %v897
        %v899 = vpop.f32.mrb[0].mxu0
        %900 = vmatprep.mubr.f32.mxu0 0.0
        %901 = vmatmul.mubr.f32.gmra.mrb[0].mxu0 %v432
        %v902 = vpop.f32.mrb[0].mxu0
        %v903 = vadd.f32 %v638, %v902
        %v904 = vpop.f32.mrb[0].mxu0
        %905 = vmatprep.mubr.f32.mxu0 0.0
        %906 = vmatmul.mubr.f32.gmra.mrb[0].mxu0 %v435
        %v907 = vpop.f32.mrb[0].mxu0
        %v908 = vadd.f32 %v643, %v907
        %v909 = vpop.f32.mrb[0].mxu0
        %910 = vmatprep.mubr.f32.mxu0 0.0
        %911 = vmatmul.mubr.f32.gmra.mrb[0].mxu0 %v438
        %v912 = vpop.f32.mrb[0].mxu0
        %v913 = vadd.f32 %v648, %v912
        %v914 = vpop.f32.mrb[0].mxu0
        %915 = vmatprep.mubr.f32.mxu0 0.0
        %916 = vmatmul.mubr.f32.gmra.mrb[0].mxu0 %v441
        %v917 = vpop.f32.mrb[0].mxu0
        %v918 = vadd.f32 %v653, %v917
        %v919 = vpop.f32.mrb[0].mxu0
        %920 = vmatprep.mubr.f32.mxu0 0.0
        %921 = vmatmul.mubr.f32.gmra.mrb[0].mxu0 %v444
        %v922 = vpop.f32.mrb[0].mxu0
        %v923 = vadd.f32 %v658, %v922
        %v924 = vpop.f32.mrb[0].mxu0
        %925 = vmatprep.mubr.f32.mxu0 0.0
        %926 = vmatmul.mubr.f32.gmra.mrb[0].mxu0 %v447
        %v927 = vpop.f32.mrb[0].mxu0
        %v928 = vadd.f32 %v663, %v927
        %v929 = vpop.f32.mrb[0].mxu0
        %930 = vmatprep.mubr.f32.mxu0 0.0
        %931 = vmatmul.mubr.f32.gmra.mrb[0].mxu0 %v450
        %v932 = vpop.f32.mrb[0].mxu0
        %v933 = vadd.f32 %v668, %v932
        %v934 = vpop.f32.mrb[0].mxu0
        %935 = vmatprep.mubr.f32.mxu0 0.0
        %936 = vmatmul.mubr.f32.gmra.mrb[0].mxu0 %v453
        %v937 = vpop.f32.mrb[0].mxu0
        %v938 = vadd.f32 %v673, %v937
        %v939 = vpop.f32.mrb[0].mxu0
        %940 = vmatprep.mubr.f32.mxu0 0.0
        %941 = vmatmul.mubr.f32.gmra.mrb[0].mxu0 %v456
        %v942 = vpop.f32.mrb[0].mxu0
        %v943 = vadd.f32 %v678, %v942
        %v944 = vpop.f32.mrb[0].mxu0
        %945 = vmatprep.mubr.f32.mxu0 0.0
        %946 = vmatmul.mubr.f32.gmra.mrb[0].mxu0 %v459
        %v947 = vpop.f32.mrb[0].mxu0
        %v948 = vadd.f32 %v683, %v947
        %v949 = vpop.f32.mrb[0].mxu0
        %950 = vmatprep.mubr.f32.mxu0 0.0
        %951 = vmatmul.mubr.f32.gmra.mrb[0].mxu0 %v462
        %v952 = vpop.f32.mrb[0].mxu0
        %v953 = vadd.f32 %v688, %v952
        %v954 = vpop.f32.mrb[0].mxu0
        %955 = vmatprep.mubr.f32.mxu0 0.0
        %956 = vmatmul.mubr.f32.gmra.mrb[0].mxu0 %v465
        %v957 = vpop.f32.mrb[0].mxu0
        %v958 = vadd.f32 %v693, %v957
        %v959 = vpop.f32.mrb[0].mxu0
        %960 = vmatprep.mubr.f32.mxu0 0.0
        %961 = vmatmul.mubr.f32.gmra.mrb[0].mxu0 %v468
        %v962 = vpop.f32.mrb[0].mxu0
        %v963 = vadd.f32 %v698, %v962
        %v964 = vpop.f32.mrb[0].mxu0
        %965 = vmatprep.mubr.f32.mxu0 0.0
        %966 = vmatmul.mubr.f32.gmra.mrb[0].mxu0 %v471
        %v967 = vpop.f32.mrb[0].mxu0
        %v968 = vadd.f32 %v703, %v967
        %v969 = vpop.f32.mrb[0].mxu0
        %970 = vmatprep.mubr.f32.mxu0 0.0
        %971 = vmatmul.mubr.f32.gmra.mrb[0].mxu0 %v474
        %v972 = vpop.f32.mrb[0].mxu0
        %v973 = vadd.f32 %v708, %v972
        %v974 = vpop.f32.mrb[0].mxu0
        %975 = vmatprep.mubr.f32.mxu0 0.0
        %976 = vmatmul.mubr.f32.gmra.mrb[0].mxu0 %v477
        %v977 = vpop.f32.mrb[0].mxu0
        %v978 = vadd.f32 %v713, %v977
        %v979 = vpop.f32.mrb[0].mxu0
        %980 = vmatprep.mubr.f32.mxu0 0.0
        %981 = vmatmul.mubr.f32.gmra.mrb[0].mxu0 %v480
        %v982 = vpop.f32.mrb[0].mxu0
        %v983 = vadd.f32 %v718, %v982
        %v984 = vpop.f32.mrb[0].mxu0
        %985 = vmatprep.mubr.f32.mxu0 0.0
        %986 = vmatmul.mubr.f32.gmra.mrb[0].mxu0 %v483
        %v987 = vpop.f32.mrb[0].mxu0
        %v988 = vadd.f32 %v723, %v987
        %v989 = vpop.f32.mrb[0].mxu0
        %990 = vmatprep.mubr.f32.mxu0 0.0
        %991 = vmatmul.mubr.f32.gmra.mrb[0].mxu0 %v486
        %v992 = vpop.f32.mrb[0].mxu0
        %v993 = vadd.f32 %v728, %v992
        %v994 = vpop.f32.mrb[0].mxu0
        %995 = vmatprep.mubr.f32.mxu0 0.0
        %996 = vmatmul.mubr.f32.gmra.mrb[0].mxu0 %v489
        %v997 = vpop.f32.mrb[0].mxu0
        %v998 = vadd.f32 %v733, %v997
        %v999 = vpop.f32.mrb[0].mxu0
        %1000 = vmatprep.mubr.f32.mxu0 0.0
        %1001 = vmatmul.mubr.f32.gmra.mrb[0].mxu0 %v492
        %v1002 = vpop.f32.mrb[0].mxu0
        %v1003 = vadd.f32 %v738, %v1002
        %v1004 = vpop.f32.mrb[0].mxu0
        %1005 = vmatprep.mubr.f32.mxu0 0.0
        %1006 = vmatmul.mubr.f32.gmra.mrb[0].mxu0 %v495
        %v1007 = vpop.f32.mrb[0].mxu0
        %v1008 = vadd.f32 %v743, %v1007
        %v1009 = vpop.f32.mrb[0].mxu0
        %1010 = vmatprep.mubr.f32.mxu0 0.0
        %1011 = vmatmul.mubr.f32.gmra.mrb[0].mxu0 %v498
        %v1012 = vpop.f32.mrb[0].mxu0
        %v1013 = vadd.f32 %v748, %v1012
        %v1014 = vpop.f32.mrb[0].mxu0
        %1015 = vmatprep.mubr.f32.mxu0 0.0
        %1016 = vmatmul.mubr.f32.gmra.mrb[0].mxu0 %v501
        %v1017 = vpop.f32.mrb[0].mxu0
        %v1018 = vadd.f32 %v753, %v1017
        %v1019 = vpop.f32.mrb[0].mxu0
        %1020 = vmatprep.mubr.f32.mxu0 0.0
        %1021 = vmatmul.mubr.f32.gmra.mrb[0].mxu0 %v504
        %v1022 = vpop.f32.mrb[0].mxu0
        %v1023 = vadd.f32 %v758, %v1022
        %v1024 = vpop.f32.mrb[0].mxu0
        %1025 = vmatprep.mubr.f32.mxu0 0.0
        %1026 = vmatmul.mubr.f32.gmra.mrb[0].mxu0 %v507
        %v1027 = vpop.f32.mrb[0].mxu0
        %v1028 = vadd.f32 %v763, %v1027
        %v1029 = vpop.f32.mrb[0].mxu0
        %1030 = vmatprep.mubr.f32.mxu0 0.0
        %1031 = vmatmul.mubr.f32.gmra.mrb[0].mxu0 %v510
        %v1032 = vpop.f32.mrb[0].mxu0
        %v1033 = vadd.f32 %v768, %v1032
        %v1034 = vpop.f32.mrb[0].mxu0
        %1035 = vmatprep.mubr.f32.mxu0 0.0
        %1036 = vmatmul.mubr.f32.gmra.mrb[0].mxu0 %v513
        %v1037 = vpop.f32.mrb[0].mxu0
        %v1038 = vadd.f32 %v773, %v1037
        %v1039 = vpop.f32.mrb[0].mxu0
        %1040 = vmatprep.mubr.f32.mxu0 0.0
        %1041 = vmatmul.mubr.f32.gmra.mrb[0].mxu0 %v516
        %v1042 = vpop.f32.mrb[0].mxu0
        %v1043 = vadd.f32 %v778, %v1042
        %v1044 = vpop.f32.mrb[0].mxu0
        %1045 = vmatprep.mubr.f32.mxu0 0.0
        %1046 = vmatmul.mubr.f32.gmra.mrb[0].mxu0 %v519
        %v1047 = vpop.f32.mrb[0].mxu0
        %v1048 = vadd.f32 %v783, %v1047
        %v1049 = vpop.f32.mrb[0].mxu0
        %1050 = vdwg.mxu0
        %vm1051 = vcmask 130048
        %v1053 = vsel %vm1051, %v853, 0
        %v1056 = vsel %vm1051, %v858, 0
        %v1059 = vsel %vm1051, %v863, 0
        %v1062 = vsel %vm1051, %v868, 0
        %v1065 = vsel %vm1051, %v873, 0
        %v1068 = vsel %vm1051, %v878, 0
        %v1071 = vsel %vm1051, %v883, 0
        %v1074 = vsel %vm1051, %v888, 0
        %v1077 = vsel %vm1051, %v893, 0
        %v1080 = vsel %vm1051, %v898, 0
        %v1083 = vsel %vm1051, %v903, 0
        %v1086 = vsel %vm1051, %v908, 0
        %v1089 = vsel %vm1051, %v913, 0
        %v1092 = vsel %vm1051, %v918, 0
        %v1095 = vsel %vm1051, %v923, 0
        %v1098 = vsel %vm1051, %v928, 0
        %v1101 = vsel %vm1051, %v933, 0
        %v1104 = vsel %vm1051, %v938, 0
        %v1107 = vsel %vm1051, %v943, 0
        %v1110 = vsel %vm1051, %v948, 0
        %v1113 = vsel %vm1051, %v953, 0
        %v1116 = vsel %vm1051, %v958, 0
        %v1119 = vsel %vm1051, %v963, 0
        %v1122 = vsel %vm1051, %v968, 0
        %v1125 = vsel %vm1051, %v973, 0
        %v1128 = vsel %vm1051, %v978, 0
        %v1131 = vsel %vm1051, %v983, 0
        %v1134 = vsel %vm1051, %v988, 0
        %v1137 = vsel %vm1051, %v993, 0
        %v1140 = vsel %vm1051, %v998, 0
        %v1143 = vsel %vm1051, %v1003, 0
        %v1146 = vsel %vm1051, %v1008, 0
        %v1149 = vsel %vm1051, %v1013, 0
        %v1152 = vsel %vm1051, %v1018, 0
        %v1155 = vsel %vm1051, %v1023, 0
        %v1158 = vsel %vm1051, %v1028, 0
        %v1161 = vsel %vm1051, %v1033, 0
        %v1164 = vsel %vm1051, %v1038, 0
        %v1167 = vsel %vm1051, %v1043, 0
        %v1170 = vsel %vm1051, %v1048, 0
        %1172 = vmatprep.subr.mxu0 0.0
        %1173 = vmatpush1.msra.mxu0 %v374
        %1174 = vmatprep.subr.mxu0 0.0
        %1175 = vmatpush1.msra.mxu0 %v375
        %1176 = vmatprep.subr.mxu0 0.0
        %1177 = vmatpush1.msra.mxu0 0.0
        %1178 = vmatprep.subr.mxu0 0.0
        %1179 = vmatpush1.msra.mxu0 0.0
        %1180 = vmatprep.subr.mxu0 0.0
        %1181 = vmatpush1.msra.mxu0 0.0
        %1182 = vmatprep.subr.mxu0 0.0
        %1183 = vmatpush1.msra.mxu0 0.0
        %1184 = vmatprep.subr.mxu0 0.0
        %1185 = vmatpush1.msra.mxu0 0.0
        %1186 = vmatprep.subr.mxu0 0.0
        %1187 = vmatpush1.msra.mxu0 0.0
        %1188 = vmatprep.subr.mxu0 0.0
        %1189 = vmatpush1.msra.mxu0 0.0
        %1190 = vmatprep.subr.mxu0 0.0
        %1191 = vmatpush1.msra.mxu0 0.0
        %1192 = vmatprep.subr.mxu0 0.0
        %1193 = vmatpush1.msra.mxu0 0.0
        %1194 = vmatprep.subr.mxu0 0.0
        %1195 = vmatpush1.msra.mxu0 0.0
        %1196 = vmatprep.subr.mxu0 0.0
        %1197 = vmatpush1.msra.mxu0 0.0
        %1198 = vmatprep.subr.mxu0 0.0
        %1199 = vmatpush1.msra.mxu0 0.0
        %1200 = vmatprep.subr.mxu0 0.0
        %1201 = vmatpush1.msra.mxu0 0.0
        %1202 = vmatprep.subr.mxu0 0.0
        %1203 = vmatpush1.msra.mxu0 0.0
        %1204 = vmatprep.subr.mxu0 0.0
        %1205 = vmatpush1.msra.mxu0 0.0
        %1206 = vmatprep.subr.mxu0 0.0
        %1207 = vmatpush1.msra.mxu0 0.0
        %1208 = vmatprep.subr.mxu0 0.0
        %1209 = vmatpush1.msra.mxu0 0.0
        %1210 = vmatprep.subr.mxu0 0.0
        %1211 = vmatpush1.msra.mxu0 0.0
        %1212 = vmatprep.subr.mxu0 0.0
        %1213 = vmatpush1.msra.mxu0 0.0
        %1214 = vmatprep.subr.mxu0 0.0
        %1215 = vmatpush1.msra.mxu0 0.0
        %1216 = vmatprep.subr.mxu0 0.0
        %1217 = vmatpush1.msra.mxu0 0.0
        %1218 = vmatprep.subr.mxu0 0.0
        %1219 = vmatpush1.msra.mxu0 0.0
        %1220 = vmatprep.subr.mxu0 0.0
        %1221 = vmatpush1.msra.mxu0 0.0
        %1222 = vmatprep.subr.mxu0 0.0
        %1223 = vmatpush1.msra.mxu0 0.0
        %1224 = vmatprep.subr.mxu0 0.0
        %1225 = vmatpush1.msra.mxu0 0.0
        %1226 = vmatprep.subr.mxu0 0.0
        %1227 = vmatpush1.msra.mxu0 0.0
        %1228 = vmatprep.subr.mxu0 0.0
        %1229 = vmatpush1.msra.mxu0 0.0
        %1230 = vmatprep.subr.mxu0 0.0
        %1231 = vmatpush1.msra.mxu0 0.0
        %1232 = vmatprep.subr.mxu0 0.0
        %1233 = vmatpush1.msra.mxu0 0.0
        %1234 = vmatprep.subr.mxu0 0.0
        %1235 = vmatpush1.msra.mxu0 0.0
        %1236 = vmatprep.mubr.f32.mxu0 0.0
        %1237 = vmatmul.mubr.f32.gmra.mrb[0].mxu0 %v1053
        %v1238 = vpop.f32.mrb[0].mxu0
        %v1239 = vadd.f32 0.0, %v1238
        %v1240 = vpop.f32.mrb[0].mxu0
        %1241 = vmatprep.mubr.f32.mxu0 0.0
        %1242 = vmatmul.mubr.f32.gmra.mrb[0].mxu0 %v1056
        %v1243 = vpop.f32.mrb[0].mxu0
        %v1244 = vadd.f32 0.0, %v1243
        %v1245 = vpop.f32.mrb[0].mxu0
        %1246 = vmatprep.mubr.f32.mxu0 0.0
        %1247 = vmatmul.mubr.f32.gmra.mrb[0].mxu0 %v1059
        %v1248 = vpop.f32.mrb[0].mxu0
        %v1249 = vadd.f32 0.0, %v1248
        %v1250 = vpop.f32.mrb[0].mxu0
        %1251 = vmatprep.mubr.f32.mxu0 0.0
        %1252 = vmatmul.mubr.f32.gmra.mrb[0].mxu0 %v1062
        %v1253 = vpop.f32.mrb[0].mxu0
        %v1254 = vadd.f32 0.0, %v1253
        %v1255 = vpop.f32.mrb[0].mxu0
        %1256 = vmatprep.mubr.f32.mxu0 0.0
        %1257 = vmatmul.mubr.f32.gmra.mrb[0].mxu0 %v1065
        %v1258 = vpop.f32.mrb[0].mxu0
        %v1259 = vadd.f32 0.0, %v1258
        %v1260 = vpop.f32.mrb[0].mxu0
        %1261 = vmatprep.mubr.f32.mxu0 0.0
        %1262 = vmatmul.mubr.f32.gmra.mrb[0].mxu0 %v1068
        %v1263 = vpop.f32.mrb[0].mxu0
        %v1264 = vadd.f32 0.0, %v1263
        %v1265 = vpop.f32.mrb[0].mxu0
        %1266 = vmatprep.mubr.f32.mxu0 0.0
        %1267 = vmatmul.mubr.f32.gmra.mrb[0].mxu0 %v1071
        %v1268 = vpop.f32.mrb[0].mxu0
        %v1269 = vadd.f32 0.0, %v1268
        %v1270 = vpop.f32.mrb[0].mxu0
        %1271 = vmatprep.mubr.f32.mxu0 0.0
        %1272 = vmatmul.mubr.f32.gmra.mrb[0].mxu0 %v1074
        %v1273 = vpop.f32.mrb[0].mxu0
        %v1274 = vadd.f32 0.0, %v1273
        %v1275 = vpop.f32.mrb[0].mxu0
        %1276 = vmatprep.mubr.f32.mxu0 0.0
        %1277 = vmatmul.mubr.f32.gmra.mrb[0].mxu0 %v1077
        %v1278 = vpop.f32.mrb[0].mxu0
        %v1279 = vadd.f32 0.0, %v1278
        %v1280 = vpop.f32.mrb[0].mxu0
        %1281 = vmatprep.mubr.f32.mxu0 0.0
        %1282 = vmatmul.mubr.f32.gmra.mrb[0].mxu0 %v1080
        %v1283 = vpop.f32.mrb[0].mxu0
        %v1284 = vadd.f32 0.0, %v1283
        %v1285 = vpop.f32.mrb[0].mxu0
        %1286 = vmatprep.mubr.f32.mxu0 0.0
        %1287 = vmatmul.mubr.f32.gmra.mrb[0].mxu0 %v1083
        %v1288 = vpop.f32.mrb[0].mxu0
        %v1289 = vadd.f32 0.0, %v1288
        %v1290 = vpop.f32.mrb[0].mxu0
        %1291 = vmatprep.mubr.f32.mxu0 0.0
        %1292 = vmatmul.mubr.f32.gmra.mrb[0].mxu0 %v1086
        %v1293 = vpop.f32.mrb[0].mxu0
        %v1294 = vadd.f32 0.0, %v1293
        %v1295 = vpop.f32.mrb[0].mxu0
        %1296 = vmatprep.mubr.f32.mxu0 0.0
        %1297 = vmatmul.mubr.f32.gmra.mrb[0].mxu0 %v1089
        %v1298 = vpop.f32.mrb[0].mxu0
        %v1299 = vadd.f32 0.0, %v1298
        %v1300 = vpop.f32.mrb[0].mxu0
        %1301 = vmatprep.mubr.f32.mxu0 0.0
        %1302 = vmatmul.mubr.f32.gmra.mrb[0].mxu0 %v1092
        %v1303 = vpop.f32.mrb[0].mxu0
        %v1304 = vadd.f32 0.0, %v1303
        %v1305 = vpop.f32.mrb[0].mxu0
        %1306 = vmatprep.mubr.f32.mxu0 0.0
        %1307 = vmatmul.mubr.f32.gmra.mrb[0].mxu0 %v1095
        %v1308 = vpop.f32.mrb[0].mxu0
        %v1309 = vadd.f32 0.0, %v1308
        %v1310 = vpop.f32.mrb[0].mxu0
        %1311 = vmatprep.mubr.f32.mxu0 0.0
        %1312 = vmatmul.mubr.f32.gmra.mrb[0].mxu0 %v1098
        %v1313 = vpop.f32.mrb[0].mxu0
        %v1314 = vadd.f32 0.0, %v1313
        %v1315 = vpop.f32.mrb[0].mxu0
        %1316 = vmatprep.mubr.f32.mxu0 0.0
        %1317 = vmatmul.mubr.f32.gmra.mrb[0].mxu0 %v1101
        %v1318 = vpop.f32.mrb[0].mxu0
        %v1319 = vadd.f32 0.0, %v1318
        %v1320 = vpop.f32.mrb[0].mxu0
        %1321 = vmatprep.mubr.f32.mxu0 0.0
        %1322 = vmatmul.mubr.f32.gmra.mrb[0].mxu0 %v1104
        %v1323 = vpop.f32.mrb[0].mxu0
        %v1324 = vadd.f32 0.0, %v1323
        %v1325 = vpop.f32.mrb[0].mxu0
        %1326 = vmatprep.mubr.f32.mxu0 0.0
        %1327 = vmatmul.mubr.f32.gmra.mrb[0].mxu0 %v1107
        %v1328 = vpop.f32.mrb[0].mxu0
        %v1329 = vadd.f32 0.0, %v1328
        %v1330 = vpop.f32.mrb[0].mxu0
        %1331 = vmatprep.mubr.f32.mxu0 0.0
        %1332 = vmatmul.mubr.f32.gmra.mrb[0].mxu0 %v1110
        %v1333 = vpop.f32.mrb[0].mxu0
        %v1334 = vadd.f32 0.0, %v1333
        %v1335 = vpop.f32.mrb[0].mxu0
        %1336 = vmatprep.mubr.f32.mxu0 0.0
        %1337 = vmatmul.mubr.f32.gmra.mrb[0].mxu0 %v1113
        %v1338 = vpop.f32.mrb[0].mxu0
        %v1339 = vadd.f32 0.0, %v1338
        %v1340 = vpop.f32.mrb[0].mxu0
        %1341 = vmatprep.mubr.f32.mxu0 0.0
        %1342 = vmatmul.mubr.f32.gmra.mrb[0].mxu0 %v1116
        %v1343 = vpop.f32.mrb[0].mxu0
        %v1344 = vadd.f32 0.0, %v1343
        %v1345 = vpop.f32.mrb[0].mxu0
        %1346 = vmatprep.mubr.f32.mxu0 0.0
        %1347 = vmatmul.mubr.f32.gmra.mrb[0].mxu0 %v1119
        %v1348 = vpop.f32.mrb[0].mxu0
        %v1349 = vadd.f32 0.0, %v1348
        %v1350 = vpop.f32.mrb[0].mxu0
        %1351 = vmatprep.mubr.f32.mxu0 0.0
        %1352 = vmatmul.mubr.f32.gmra.mrb[0].mxu0 %v1122
        %v1353 = vpop.f32.mrb[0].mxu0
        %v1354 = vadd.f32 0.0, %v1353
        %v1355 = vpop.f32.mrb[0].mxu0
        %1356 = vmatprep.mubr.f32.mxu0 0.0
        %1357 = vmatmul.mubr.f32.gmra.mrb[0].mxu0 %v1125
        %v1358 = vpop.f32.mrb[0].mxu0
        %v1359 = vadd.f32 0.0, %v1358
        %v1360 = vpop.f32.mrb[0].mxu0
        %1361 = vmatprep.mubr.f32.mxu0 0.0
        %1362 = vmatmul.mubr.f32.gmra.mrb[0].mxu0 %v1128
        %v1363 = vpop.f32.mrb[0].mxu0
        %v1364 = vadd.f32 0.0, %v1363
        %v1365 = vpop.f32.mrb[0].mxu0
        %1366 = vmatprep.mubr.f32.mxu0 0.0
        %1367 = vmatmul.mubr.f32.gmra.mrb[0].mxu0 %v1131
        %v1368 = vpop.f32.mrb[0].mxu0
        %v1369 = vadd.f32 0.0, %v1368
        %v1370 = vpop.f32.mrb[0].mxu0
        %1371 = vmatprep.mubr.f32.mxu0 0.0
        %1372 = vmatmul.mubr.f32.gmra.mrb[0].mxu0 %v1134
        %v1373 = vpop.f32.mrb[0].mxu0
        %v1374 = vadd.f32 0.0, %v1373
        %v1375 = vpop.f32.mrb[0].mxu0
        %1376 = vmatprep.mubr.f32.mxu0 0.0
        %1377 = vmatmul.mubr.f32.gmra.mrb[0].mxu0 %v1137
        %v1378 = vpop.f32.mrb[0].mxu0
        %v1379 = vadd.f32 0.0, %v1378
        %v1380 = vpop.f32.mrb[0].mxu0
        %1381 = vmatprep.mubr.f32.mxu0 0.0
        %1382 = vmatmul.mubr.f32.gmra.mrb[0].mxu0 %v1140
        %v1383 = vpop.f32.mrb[0].mxu0
        %v1384 = vadd.f32 0.0, %v1383
        %v1385 = vpop.f32.mrb[0].mxu0
        %1386 = vmatprep.mubr.f32.mxu0 0.0
        %1387 = vmatmul.mubr.f32.gmra.mrb[0].mxu0 %v1143
        %v1388 = vpop.f32.mrb[0].mxu0
        %v1389 = vadd.f32 0.0, %v1388
        %v1390 = vpop.f32.mrb[0].mxu0
        %1391 = vmatprep.mubr.f32.mxu0 0.0
        %1392 = vmatmul.mubr.f32.gmra.mrb[0].mxu0 %v1146
        %v1393 = vpop.f32.mrb[0].mxu0
        %v1394 = vadd.f32 0.0, %v1393
        %v1395 = vpop.f32.mrb[0].mxu0
        %1396 = vmatprep.mubr.f32.mxu0 0.0
        %1397 = vmatmul.mubr.f32.gmra.mrb[0].mxu0 %v1149
        %v1398 = vpop.f32.mrb[0].mxu0
        %v1399 = vadd.f32 0.0, %v1398
        %v1400 = vpop.f32.mrb[0].mxu0
        %1401 = vmatprep.mubr.f32.mxu0 0.0
        %1402 = vmatmul.mubr.f32.gmra.mrb[0].mxu0 %v1152
        %v1403 = vpop.f32.mrb[0].mxu0
        %v1404 = vadd.f32 0.0, %v1403
        %v1405 = vpop.f32.mrb[0].mxu0
        %1406 = vmatprep.mubr.f32.mxu0 0.0
        %1407 = vmatmul.mubr.f32.gmra.mrb[0].mxu0 %v1155
        %v1408 = vpop.f32.mrb[0].mxu0
        %v1409 = vadd.f32 0.0, %v1408
        %v1410 = vpop.f32.mrb[0].mxu0
        %1411 = vmatprep.mubr.f32.mxu0 0.0
        %1412 = vmatmul.mubr.f32.gmra.mrb[0].mxu0 %v1158
        %v1413 = vpop.f32.mrb[0].mxu0
        %v1414 = vadd.f32 0.0, %v1413
        %v1415 = vpop.f32.mrb[0].mxu0
        %1416 = vmatprep.mubr.f32.mxu0 0.0
        %1417 = vmatmul.mubr.f32.gmra.mrb[0].mxu0 %v1161
        %v1418 = vpop.f32.mrb[0].mxu0
        %v1419 = vadd.f32 0.0, %v1418
        %v1420 = vpop.f32.mrb[0].mxu0
        %1421 = vmatprep.mubr.f32.mxu0 0.0
        %1422 = vmatmul.mubr.f32.gmra.mrb[0].mxu0 %v1164
        %v1423 = vpop.f32.mrb[0].mxu0
        %v1424 = vadd.f32 0.0, %v1423
        %v1425 = vpop.f32.mrb[0].mxu0
        %1426 = vmatprep.mubr.f32.mxu0 0.0
        %1427 = vmatmul.mubr.f32.gmra.mrb[0].mxu0 %v1167
        %v1428 = vpop.f32.mrb[0].mxu0
        %v1429 = vadd.f32 0.0, %v1428
        %v1430 = vpop.f32.mrb[0].mxu0
        %1431 = vmatprep.mubr.f32.mxu0 0.0
        %1432 = vmatmul.mubr.f32.gmra.mrb[0].mxu0 %v1170
        %v1433 = vpop.f32.mrb[0].mxu0
        %v1434 = vadd.f32 0.0, %v1433
        %v1435 = vpop.f32.mrb[0].mxu0
        %1436 = vdwg.mxu0
        %v1437 = vmul.f32 %v1239, %v1239
        %v1438 = vmul.f32 %v1244, %v1244
        %v1439 = vmul.f32 %v1249, %v1249
        %v1440 = vmul.f32 %v1254, %v1254
        %v1441 = vmul.f32 %v1259, %v1259
        %v1442 = vmul.f32 %v1264, %v1264
        %v1443 = vmul.f32 %v1269, %v1269
        %v1444 = vmul.f32 %v1274, %v1274
        %v1445 = vmul.f32 %v1279, %v1279
        %v1446 = vmul.f32 %v1284, %v1284
        %v1447 = vmul.f32 %v1289, %v1289
        %v1448 = vmul.f32 %v1294, %v1294
        %v1449 = vmul.f32 %v1299, %v1299
        %v1450 = vmul.f32 %v1304, %v1304
        %v1451 = vmul.f32 %v1309, %v1309
        %v1452 = vmul.f32 %v1314, %v1314
        %v1453 = vmul.f32 %v1239, %v1279
        %v1454 = vmul.f32 %v1244, %v1284
        %v1455 = vmul.f32 %v1249, %v1289
        %v1456 = vmul.f32 %v1254, %v1294
        %v1457 = vmul.f32 %v1259, %v1299
        %v1458 = vmul.f32 %v1264, %v1304
        %v1459 = vmul.f32 %v1269, %v1309
        %v1460 = vmul.f32 %v1274, %v1314
        %v1461 = vsub.f32 %v1319, %v1437
        %v1462 = vsub.f32 %v1324, %v1438
        %v1463 = vsub.f32 %v1329, %v1439
        %v1464 = vsub.f32 %v1334, %v1440
        %v1465 = vsub.f32 %v1339, %v1441
        %v1466 = vsub.f32 %v1344, %v1442
        %v1467 = vsub.f32 %v1349, %v1443
        %v1468 = vsub.f32 %v1354, %v1444
        %v1469 = vsub.f32 %v1359, %v1445
        %v1470 = vsub.f32 %v1364, %v1446
        %v1471 = vsub.f32 %v1369, %v1447
        %v1472 = vsub.f32 %v1374, %v1448
        %v1473 = vsub.f32 %v1379, %v1449
        %v1474 = vsub.f32 %v1384, %v1450
        %v1475 = vsub.f32 %v1389, %v1451
        %v1476 = vsub.f32 %v1394, %v1452
        %v1477 = vsub.f32 %v1399, %v1453
        %v1478 = vsub.f32 %v1404, %v1454
        %v1479 = vsub.f32 %v1409, %v1455
        %v1480 = vsub.f32 %v1414, %v1456
        %v1481 = vsub.f32 %v1419, %v1457
        %v1482 = vsub.f32 %v1424, %v1458
        %v1483 = vsub.f32 %v1429, %v1459
        %v1484 = vsub.f32 %v1434, %v1460
        %v1485 = vmul.f32 %v1453, 2.0
        %v1486 = vmul.f32 %v1454, 2.0
        %v1487 = vmul.f32 %v1455, 2.0
        %v1488 = vmul.f32 %v1456, 2.0
        %v1489 = vmul.f32 %v1457, 2.0
        %v1490 = vmul.f32 %v1458, 2.0
        %v1491 = vmul.f32 %v1459, 2.0
        %v1492 = vmul.f32 %v1460, 2.0
        %v1493 = vadd.f32 %v1485, 0.0001
        %v1494 = vadd.f32 %v1486, 0.0001
        %v1495 = vadd.f32 %v1487, 0.0001
        %v1496 = vadd.f32 %v1488, 0.0001
        %v1497 = vadd.f32 %v1489, 0.0001
        %v1498 = vadd.f32 %v1490, 0.0001
        %v1499 = vadd.f32 %v1491, 0.0001
        %v1500 = vadd.f32 %v1492, 0.0001
        %v1501 = vmul.f32 %v1477, 2.0
        %v1502 = vmul.f32 %v1478, 2.0
        %v1503 = vmul.f32 %v1479, 2.0
        %v1504 = vmul.f32 %v1480, 2.0
        %v1505 = vmul.f32 %v1481, 2.0
        %v1506 = vmul.f32 %v1482, 2.0
        %v1507 = vmul.f32 %v1483, 2.0
        %v1508 = vmul.f32 %v1484, 2.0
        %v1509 = vadd.f32 %v1501, 0.0009
        %v1510 = vadd.f32 %v1502, 0.0009
        %v1511 = vadd.f32 %v1503, 0.0009
        %v1512 = vadd.f32 %v1504, 0.0009
        %v1513 = vadd.f32 %v1505, 0.0009
        %v1514 = vadd.f32 %v1506, 0.0009
        %v1515 = vadd.f32 %v1507, 0.0009
        %v1516 = vadd.f32 %v1508, 0.0009
        %v1517 = vmul.f32 %v1493, %v1509
        %v1518 = vmul.f32 %v1494, %v1510
        %v1519 = vmul.f32 %v1495, %v1511
        %v1520 = vmul.f32 %v1496, %v1512
        %v1521 = vmul.f32 %v1497, %v1513
        %v1522 = vmul.f32 %v1498, %v1514
        %v1523 = vmul.f32 %v1499, %v1515
        %v1524 = vmul.f32 %v1500, %v1516
        %v1525 = vadd.f32 %v1437, %v1445
        %v1526 = vadd.f32 %v1438, %v1446
        %v1527 = vadd.f32 %v1439, %v1447
        %v1528 = vadd.f32 %v1440, %v1448
        %v1529 = vadd.f32 %v1441, %v1449
        %v1530 = vadd.f32 %v1442, %v1450
        %v1531 = vadd.f32 %v1443, %v1451
        %v1532 = vadd.f32 %v1444, %v1452
        %v1533 = vadd.f32 %v1525, 0.0001
        %v1534 = vadd.f32 %v1526, 0.0001
        %v1535 = vadd.f32 %v1527, 0.0001
        %v1536 = vadd.f32 %v1528, 0.0001
        %v1537 = vadd.f32 %v1529, 0.0001
        %v1538 = vadd.f32 %v1530, 0.0001
        %v1539 = vadd.f32 %v1531, 0.0001
        %v1540 = vadd.f32 %v1532, 0.0001
        %v1541 = vadd.f32 %v1461, %v1469
        %v1542 = vadd.f32 %v1462, %v1470
        %v1543 = vadd.f32 %v1463, %v1471
        %v1544 = vadd.f32 %v1464, %v1472
        %v1545 = vadd.f32 %v1465, %v1473
        %v1546 = vadd.f32 %v1466, %v1474
        %v1547 = vadd.f32 %v1467, %v1475
        %v1548 = vadd.f32 %v1468, %v1476
        %v1549 = vadd.f32 %v1541, 0.0009
        %v1550 = vadd.f32 %v1542, 0.0009
        %v1551 = vadd.f32 %v1543, 0.0009
        %v1552 = vadd.f32 %v1544, 0.0009
        %v1553 = vadd.f32 %v1545, 0.0009
        %v1554 = vadd.f32 %v1546, 0.0009
        %v1555 = vadd.f32 %v1547, 0.0009
        %v1556 = vadd.f32 %v1548, 0.0009
        %v1557 = vmul.f32 %v1533, %v1549
        %v1558 = vmul.f32 %v1534, %v1550
        %v1559 = vmul.f32 %v1535, %v1551
        %v1560 = vmul.f32 %v1536, %v1552
        %v1561 = vmul.f32 %v1537, %v1553
        %v1562 = vmul.f32 %v1538, %v1554
        %v1563 = vmul.f32 %v1539, %v1555
        %v1564 = vmul.f32 %v1540, %v1556
        %v1565 = vrcp.pop %v1557
        %v1566 = vmul.f32 %v1517, %v1565
        %v1567 = vrcp.pop %v1558
        %v1568 = vmul.f32 %v1518, %v1567
        %v1569 = vrcp.pop %v1559
        %v1570 = vmul.f32 %v1519, %v1569
        %v1571 = vrcp.pop %v1560
        %v1572 = vmul.f32 %v1520, %v1571
        %v1573 = vrcp.pop %v1561
        %v1574 = vmul.f32 %v1521, %v1573
        %v1575 = vrcp.pop %v1562
        %v1576 = vmul.f32 %v1522, %v1575
        %v1577 = vrcp.pop %v1563
        %v1578 = vmul.f32 %v1523, %v1577
        %v1579 = vrcp.pop %v1564
        %v1580 = vmul.f32 %v1524, %v1579
        %v1581 = vsel %vm1051, %v1566, 0.0
        %1582 = vadd.xlane.f32.xlu0 %v1581
        %v1583 = vpop.xlane.xlu0 %1582
        %v1584 = vsel %vm1051, %v1568, 0.0
        %1585 = vadd.xlane.f32.xlu0 %v1584
        %v1586 = vpop.xlane.xlu0 %1585
        %v1587 = vsel %vm1051, %v1570, 0.0
        %1588 = vadd.xlane.f32.xlu0 %v1587
        %v1589 = vpop.xlane.xlu0 %1588
        %v1590 = vsel %vm1051, %v1572, 0.0
        %1591 = vadd.xlane.f32.xlu0 %v1590
        %v1592 = vpop.xlane.xlu0 %1591
        %v1593 = vsel %vm1051, %v1574, 0.0
        %1594 = vadd.xlane.f32.xlu0 %v1593
        %v1595 = vpop.xlane.xlu0 %1594
        %v1596 = vsel %vm1051, %v1576, 0.0
        %1597 = vadd.xlane.f32.xlu0 %v1596
        %v1598 = vpop.xlane.xlu0 %1597
        %v1599 = vsel %vm1051, %v1578, 0.0
        %1600 = vadd.xlane.f32.xlu0 %v1599
        %v1601 = vpop.xlane.xlu0 %1600
        %v1602 = vsel %vm1051, %v1580, 0.0
        %1603 = vadd.xlane.f32.xlu0 %v1602
        %v1604 = vpop.xlane.xlu0 %1603
        %vm1605 = vcmask 7168
        %1606 = vst.msk [vmem:[%s236] sm:$0xff] %vm1605, %v1583
        %1607 = vst.msk [vmem:[%s236 + $0x8] sm:$0xff] %vm1605, %v1586
        %1608 = vst.msk [vmem:[%s236 + $0x10] sm:$0xff] %vm1605, %v1589
        %1609 = vst.msk [vmem:[%s236 + $0x18] sm:$0xff] %vm1605, %v1592
        %1610 = vst.msk [vmem:[%s236 + $0x20] sm:$0xff] %vm1605, %v1595
        %1611 = vst.msk [vmem:[%s236 + $0x28] sm:$0xff] %vm1605, %v1598
        %1612 = vst.msk [vmem:[%s236 + $0x30] sm:$0xff] %vm1605, %v1601
        %1613 = vst.msk [vmem:[%s236 + $0x38] sm:$0xff] %vm1605, %v1604
        %s1614 = smul.u32 8, %s16
        %p1615 = scmp.lt.s32.totalorder %s1614, 15
        %s1616 = scalar_select %p1615, %s1614, 15
        %s1617 = smul.addr %s1616, 8
        %s1618 = scalar_lea.vmem %s4, %s1617
        // Predicated region
        $region41: #{tpu_custom_call.1} parent=35 // pred_check
          %p1619 = pneg %p128
        $region42: #{tpu_custom_call.1} parent=35 // pred_check_branch
          %1621 = sbr.rel (%p1619) target = $region44
        $region43: #{tpu_custom_call.1} parent=35 // pred_region
          %s1622 = smul.u32 8, %s16
        $region44: #{tpu_custom_call.1} parent=35 // pred_fallthru
          _
      $region36: #{tpu_custom_call.1} parent=5 // pred_fallthru
        _
      %p1623 = scmp.le.s32.totalorder 2, %s11
      // Predicated region
      $region45: #{tpu_custom_call.1} parent=5 // pred_check
        %p1624 = pneg %p1623
      $region46: #{tpu_custom_call.1} parent=5 // pred_check_branch
        %1626 = sbr.rel (%p1624) target = $region48
      $region47: #{tpu_custom_call.1} parent=5 // pred_region
        %s1627 = ssub.s32 %s11, 2
        // Predicated region
        $region49: #{tpu_custom_call.1} parent=47 // pred_check
          %p1628 = pneg %p134
        $region50: #{tpu_custom_call.1} parent=47 // pred_check_branch
          %1630 = sbr.rel (%p1628) target = $region52
        $region51: #{tpu_custom_call.1} parent=47 // pred_region
          %s1631 = smul.u32 8, %s17
          %p1632 = scmp.lt.s32.totalorder %s1631, 15
          %s1633 = scalar_select %p1632, %s1631, 15
          %s1634 = smul.addr %s1633, 8
          %s1635 = scalar_lea.vmem %s4, %s1634
        $region52: #{tpu_custom_call.1} parent=47 // pred_fallthru
          _
      $region48: #{tpu_custom_call.1} parent=5 // pred_fallthru
        _
    $region6: #{tpu_custom_call.1} parent=1 // loop_footer
      %s15 = sadd.s32 1, %s11
    $region7: #{tpu_custom_call.1} parent=1 // loop_footer_branch
      %10 = sbr.rel target = $region3
    $region8: #{tpu_custom_call.1} parent=1 // loop_exit
      _
    %1636 = vsyncpa [#allocation3], 1
    %s1637 = scalar_lea.sflag [#allocation3], 1
    %1638 = vsyncpa %s1637, 1

</llo_original>
